<compile_context>
chip_gen: v7x
topology: tpu7x:2x2x1
jax: 0.10.0
libtpu: 0.0.40
codegen_flags: <defaults>
</compile_context>

<pallas_src>
import functools

import jax
import jax.numpy as jnp
from jax.experimental import pallas as pl
from jax.experimental.pallas import tpu as pltpu


def _bernoulli_scale(seed_u32, row0_u32, col0_u32, shape):
    """Deterministic Bernoulli(0.5) dropout mask scaled by 1/(1-p)=2.

    Hash of (seed, global row index, global feature index) using the
    lowbias32 integer finalizer; returns f32 values in {0.0, 2.0}.
    """
    rows = jax.lax.broadcasted_iota(jnp.int32, shape, 0).astype(jnp.uint32)
    cols = jax.lax.broadcasted_iota(jnp.int32, shape, 1).astype(jnp.uint32)
    x = seed_u32 + (rows + row0_u32) * jnp.uint32(0x9E3779B9) \
        + (cols + col0_u32) * jnp.uint32(0x85EBCA6B)
    # lowbias32 finalizer
    x = x ^ (x >> 16)
    x = x * jnp.uint32(0x7FEB352D)
    x = x ^ (x >> 15)
    x = x * jnp.uint32(0x846CA68B)
    x = x ^ (x >> 16)
    keep = (x & jnp.uint32(0x80000000)) != 0          # Bernoulli(0.5)
    return jnp.where(keep, jnp.float32(2.0), jnp.float32(0.0))


def _prenet_kernel(seed_ref, x_ref, w1_ref, b1_ref, w2_ref, b2_ref, o_ref,
                   *, training: bool, tile_n: int, h1: int):
    """One grid step: a (tile_n, in_dim) row-tile through both prenet layers."""
    if training:
        seed = seed_ref[0].astype(jnp.uint32)
        row0 = (pl.program_id(0) * tile_n).astype(jnp.uint32)

    # ---- layer 1: Linear + ReLU + Dropout(0.5) ----
    h = jnp.dot(x_ref[...].astype(jnp.bfloat16), w1_ref[...],
                preferred_element_type=jnp.float32)
    h = h + b1_ref[...]
    h = jnp.maximum(h, 0.0)
    if training:
        h = h * _bernoulli_scale(seed, row0, jnp.uint32(0), h.shape)

    # ---- layer 2: Linear + ReLU + Dropout(0.5) ----
    h2 = jnp.dot(h.astype(jnp.bfloat16), w2_ref[...],
                 preferred_element_type=jnp.float32)
    h2 = h2 + b2_ref[...]
    h2 = jnp.maximum(h2, 0.0)
    if training:
        h2 = h2 * _bernoulli_scale(seed, row0, jnp.uint32(h1), h2.shape)

    o_ref[...] = h2.astype(o_ref.dtype)


def prenet_tones_forward(inputs, inputs_tones, params, *, seed=0,
                         training=True, tile_n=256):
    """Pallas implementation of Prenet_tones.forward(inputs, inputs_tones).

    inputs:       (B, T, in_dim) float32
    inputs_tones: accepted and ignored (matches the PyTorch forward)
    params: dict with w1 (in_dim, H1), b1 (H1,), w2 (H1, H2), b2 (H2,)
    """
    del inputs_tones  # unused, exactly like the reference forward
    B, T, in_dim = inputs.shape
    w1, b1, w2, b2 = params["w1"], params["b1"], params["w2"], params["b2"]
    H1 = w1.shape[1]
    H2 = w2.shape[1]

    N = B * T
    grid_n = pl.cdiv(N, tile_n)
    n_pad = grid_n * tile_n

    # bf16 activations / weights for the MXU; f32 accumulation in-kernel.
    x2d = inputs.reshape(N, in_dim).astype(jnp.bfloat16)
    if n_pad != N:
        x2d = jnp.pad(x2d, ((0, n_pad - N), (0, 0)))
    w1_bf = w1.astype(jnp.bfloat16)
    w2_bf = w2.astype(jnp.bfloat16)
    b1_2d = b1.reshape(1, H1).astype(jnp.float32)
    b2_2d = b2.reshape(1, H2).astype(jnp.float32)
    seed_arr = jnp.array([seed], dtype=jnp.int32)

    kernel = functools.partial(_prenet_kernel, training=training,
                               tile_n=tile_n, h1=H1)

    out2d = pl.pallas_call(
        kernel,
        out_shape=jax.ShapeDtypeStruct((n_pad, H2), jnp.float32),
        grid_spec=pltpu.PrefetchScalarGridSpec(
            num_scalar_prefetch=1,            # the seed lands in SMEM
            grid=(grid_n,),
            in_specs=[
                pl.BlockSpec((tile_n, in_dim), lambda i, s: (i, 0)),
                pl.BlockSpec((in_dim, H1),     lambda i, s: (0, 0)),
                pl.BlockSpec((1, H1),          lambda i, s: (0, 0)),
                pl.BlockSpec((H1, H2),         lambda i, s: (0, 0)),
                pl.BlockSpec((1, H2),          lambda i, s: (0, 0)),
            ],
            out_specs=pl.BlockSpec((tile_n, H2), lambda i, s: (i, 0)),
        ),
        compiler_params=pltpu.CompilerParams(
            # Row tiles are independent (hash-based dropout), so let v7x
            # shard the grid across both TensorCores.
            dimension_semantics=("parallel",)),
    )(seed_arr, x2d, w1_bf, b1_2d, w2_bf, b2_2d)

    return out2d[:N].reshape(B, T, H2)


def init_prenet_params(key, in_dim, sizes=(256, 128)):
    """Deterministic init matching nn.Linear's U(-1/sqrt(fan_in), 1/sqrt(fan_in))."""
    in_sizes = [in_dim] + list(sizes[:-1])
    params = {}
    for idx, (fan_in, fan_out) in enumerate(zip(in_sizes, sizes), start=1):
        key, kw, kb = jax.random.split(key, 3)
        bound = 1.0 / (fan_in ** 0.5)
        params[f"w{idx}"] = jax.random.uniform(
            kw, (fan_in, fan_out), jnp.float32, -bound, bound)
        params[f"b{idx}"] = jax.random.uniform(
            kb, (fan_out,), jnp.float32, -bound, bound)
    return params


if __name__ == "__main__":
    key = jax.random.PRNGKey(0)
    k_in, k_tones, k_par = jax.random.split(key, 3)

    B, T, in_dim = 2, 8, 32
    sizes = (256, 128)

    inputs = jax.random.normal(k_in, (B, T, in_dim), jnp.float32)
    inputs_tones = jax.random.normal(k_tones, (B, T, in_dim), jnp.float32)
    params = init_prenet_params(k_par, in_dim, sizes)

    # Training-mode dropout (faithful to nn.Dropout(0.5) being active in train()).
    out = prenet_tones_forward(inputs, inputs_tones, params,
                               seed=1234, training=True)
    out = jax.block_until_ready(out)
    assert out.shape == (B, T, sizes[-1])
    assert bool(jnp.all(jnp.isfinite(out)))

    # Sanity check against a pure-JAX reference in eval mode (dropout = identity),
    # with the same bf16-matmul / f32-accumulate numerics as the kernel.
    out_eval = prenet_tones_forward(inputs, inputs_tones, params,
                                    seed=0, training=False)
    out_eval = jax.block_until_ready(out_eval)

    xb = inputs.reshape(-1, in_dim).astype(jnp.bfloat16)
    h = jnp.maximum(
        jnp.dot(xb, params["w1"].astype(jnp.bfloat16),
                preferred_element_type=jnp.float32) + params["b1"], 0.0)
    ref = jnp.maximum(
        jnp.dot(h.astype(jnp.bfloat16), params["w2"].astype(jnp.bfloat16),
                preferred_element_type=jnp.float32) + params["b2"], 0.0)
    ref = ref.reshape(B, T, sizes[-1])
    assert jnp.allclose(out_eval, ref, atol=1e-3, rtol=1e-3), \
        float(jnp.max(jnp.abs(out_eval - ref)))

    print("KERNEL_OK")
</pallas_src>

<mosaic_0001>
module attributes {stable_mosaic.version = 11 : i64} {
  func.func @_prenet_kernel(%arg0: i32, %arg1: memref<1xi32, #tpu.memory_space<smem>>, %arg2: memref<256x32xbf16, #tpu.memory_space<vmem>>, %arg3: memref<32x256xbf16, #tpu.memory_space<vmem>>, %arg4: memref<1x256xf32, #tpu.memory_space<vmem>>, %arg5: memref<256x128xbf16, #tpu.memory_space<vmem>>, %arg6: memref<1x128xf32, #tpu.memory_space<vmem>>, %arg7: memref<256x128xf32, #tpu.memory_space<vmem>>) attributes {dimension_semantics = [#tpu.dimension_semantics<parallel>], iteration_bounds = array<i64: 1>, scalar_prefetch = 1 : i64, scratch_operands = 0 : i64, tpu.core_type = #tpu.core_type<tc>, window_params = [{transform_indices = @transform_0, window_bounds = array<i64: 256, 32>}, {pipeline_mode = #tpu.pipeline_mode<synchronous>, transform_indices = @transform_1, window_bounds = array<i64: 32, 256>}, {pipeline_mode = #tpu.pipeline_mode<synchronous>, transform_indices = @transform_2, window_bounds = array<i64: 1, 256>}, {pipeline_mode = #tpu.pipeline_mode<synchronous>, transform_indices = @transform_3, window_bounds = array<i64: 256, 128>}, {pipeline_mode = #tpu.pipeline_mode<synchronous>, transform_indices = @transform_4, window_bounds = array<i64: 1, 128>}, {transform_indices = @transform_5, window_bounds = array<i64: 256, 128>}]} {
    %c0 = arith.constant 0 : index
    %0 = memref.load %arg1[%c0] : memref<1xi32, #tpu.memory_space<smem>>
    %c256_i32 = arith.constant 256 : i32
    %1 = arith.muli %arg0, %c256_i32 : i32
    %c0_0 = arith.constant 0 : index
    %c0_1 = arith.constant 0 : index
    %2 = vector.load %arg2[%c0_0, %c0_1] : memref<256x32xbf16, #tpu.memory_space<vmem>>, vector<256x32xbf16>
    %c0_2 = arith.constant 0 : index
    %c0_3 = arith.constant 0 : index
    %3 = vector.load %arg3[%c0_2, %c0_3] : memref<32x256xbf16, #tpu.memory_space<vmem>>, vector<32x256xbf16>
    %cst = arith.constant dense<0.000000e+00> : vector<256x256xf32>
    %4 = tpu.matmul %2, %3, %cst {dimension_numbers = #tpu.dot_dimension_numbers<[1], [0], [0], [1], [0, 0, 1, 1], [], []>} : vector<256x32xbf16>, vector<32x256xbf16>, vector<256x256xf32> -> vector<256x256xf32>
    %c0_4 = arith.constant 0 : index
    %c0_5 = arith.constant 0 : index
    %5 = vector.load %arg4[%c0_4, %c0_5] : memref<1x256xf32, #tpu.memory_space<vmem>>, vector<1x256xf32>
    %6 = vector.broadcast %5 : vector<1x256xf32> to vector<256x256xf32>
    %7 = arith.addf %4, %6 : vector<256x256xf32>
    %cst_6 = arith.constant 0.000000e+00 : f32
    %8 = vector.broadcast %cst_6 : f32 to vector<256x256xf32>
    %9 = arith.maximumf %7, %8 : vector<256x256xf32>
    %10 = tpu.iota {dimensions = array<i32: 0>} : vector<256x256xi32>
    %11 = tpu.iota {dimensions = array<i32: 1>} : vector<256x256xi32>
    %12 = vector.broadcast %1 : i32 to vector<256x256xi32>
    %13 = arith.addi %10, %12 : vector<256x256xi32>
    %c-1640531527_i32 = arith.constant -1640531527 : i32
    %14 = vector.broadcast %c-1640531527_i32 : i32 to vector<256x256xi32>
    %15 = arith.muli %13, %14 : vector<256x256xi32>
    %16 = vector.broadcast %0 : i32 to vector<256x256xi32>
    %17 = arith.addi %16, %15 : vector<256x256xi32>
    %c0_i32 = arith.constant 0 : i32
    %18 = vector.broadcast %c0_i32 : i32 to vector<256x256xi32>
    %19 = arith.addi %11, %18 : vector<256x256xi32>
    %c-2048144789_i32 = arith.constant -2048144789 : i32
    %20 = vector.broadcast %c-2048144789_i32 : i32 to vector<256x256xi32>
    %21 = arith.muli %19, %20 : vector<256x256xi32>
    %22 = arith.addi %17, %21 : vector<256x256xi32>
    %c16_i32 = arith.constant 16 : i32
    %23 = vector.broadcast %c16_i32 : i32 to vector<256x256xi32>
    %24 = arith.shrui %22, %23 : vector<256x256xi32>
    %25 = arith.xori %22, %24 : vector<256x256xi32>
    %c2146121005_i32 = arith.constant 2146121005 : i32
    %26 = vector.broadcast %c2146121005_i32 : i32 to vector<256x256xi32>
    %27 = arith.muli %25, %26 : vector<256x256xi32>
    %c15_i32 = arith.constant 15 : i32
    %28 = vector.broadcast %c15_i32 : i32 to vector<256x256xi32>
    %29 = arith.shrui %27, %28 : vector<256x256xi32>
    %30 = arith.xori %27, %29 : vector<256x256xi32>
    %c-2073254261_i32 = arith.constant -2073254261 : i32
    %31 = vector.broadcast %c-2073254261_i32 : i32 to vector<256x256xi32>
    %32 = arith.muli %30, %31 : vector<256x256xi32>
    %c16_i32_7 = arith.constant 16 : i32
    %33 = vector.broadcast %c16_i32_7 : i32 to vector<256x256xi32>
    %34 = arith.shrui %32, %33 : vector<256x256xi32>
    %35 = arith.xori %32, %34 : vector<256x256xi32>
    %c-2147483648_i32 = arith.constant -2147483648 : i32
    %36 = vector.broadcast %c-2147483648_i32 : i32 to vector<256x256xi32>
    %37 = arith.andi %35, %36 : vector<256x256xi32>
    %c0_i32_8 = arith.constant 0 : i32
    %38 = vector.broadcast %c0_i32_8 : i32 to vector<256x256xi32>
    %39 = arith.cmpi ne, %37, %38 : vector<256x256xi32>
    %cst_9 = arith.constant 2.000000e+00 : f32
    %cst_10 = arith.constant 0.000000e+00 : f32
    %40 = vector.broadcast %cst_9 : f32 to vector<256x256xf32>
    %41 = vector.broadcast %cst_10 : f32 to vector<256x256xf32>
    %42 = arith.select %39, %40, %41 : vector<256x256xi1>, vector<256x256xf32>
    %43 = arith.mulf %9, %42 : vector<256x256xf32>
    %44 = arith.truncf %43 : vector<256x256xf32> to vector<256x256xbf16>
    %c0_11 = arith.constant 0 : index
    %c0_12 = arith.constant 0 : index
    %45 = vector.load %arg5[%c0_11, %c0_12] : memref<256x128xbf16, #tpu.memory_space<vmem>>, vector<256x128xbf16>
    %cst_13 = arith.constant dense<0.000000e+00> : vector<256x128xf32>
    %46 = tpu.matmul %44, %45, %cst_13 {dimension_numbers = #tpu.dot_dimension_numbers<[1], [0], [0], [1], [0, 0, 1, 1], [], []>} : vector<256x256xbf16>, vector<256x128xbf16>, vector<256x128xf32> -> vector<256x128xf32>
    %c0_14 = arith.constant 0 : index
    %c0_15 = arith.constant 0 : index
    %47 = vector.load %arg6[%c0_14, %c0_15] : memref<1x128xf32, #tpu.memory_space<vmem>>, vector<1x128xf32>
    %48 = vector.broadcast %47 : vector<1x128xf32> to vector<256x128xf32>
    %49 = arith.addf %46, %48 : vector<256x128xf32>
    %cst_16 = arith.constant 0.000000e+00 : f32
    %50 = vector.broadcast %cst_16 : f32 to vector<256x128xf32>
    %51 = arith.maximumf %49, %50 : vector<256x128xf32>
    %52 = tpu.iota {dimensions = array<i32: 0>} : vector<256x128xi32>
    %53 = tpu.iota {dimensions = array<i32: 1>} : vector<256x128xi32>
    %54 = vector.broadcast %1 : i32 to vector<256x128xi32>
    %55 = arith.addi %52, %54 : vector<256x128xi32>
    %c-1640531527_i32_17 = arith.constant -1640531527 : i32
    %56 = vector.broadcast %c-1640531527_i32_17 : i32 to vector<256x128xi32>
    %57 = arith.muli %55, %56 : vector<256x128xi32>
    %58 = vector.broadcast %0 : i32 to vector<256x128xi32>
    %59 = arith.addi %58, %57 : vector<256x128xi32>
    %c256_i32_18 = arith.constant 256 : i32
    %60 = vector.broadcast %c256_i32_18 : i32 to vector<256x128xi32>
    %61 = arith.addi %53, %60 : vector<256x128xi32>
    %c-2048144789_i32_19 = arith.constant -2048144789 : i32
    %62 = vector.broadcast %c-2048144789_i32_19 : i32 to vector<256x128xi32>
    %63 = arith.muli %61, %62 : vector<256x128xi32>
    %64 = arith.addi %59, %63 : vector<256x128xi32>
    %c16_i32_20 = arith.constant 16 : i32
    %65 = vector.broadcast %c16_i32_20 : i32 to vector<256x128xi32>
    %66 = arith.shrui %64, %65 : vector<256x128xi32>
    %67 = arith.xori %64, %66 : vector<256x128xi32>
    %c2146121005_i32_21 = arith.constant 2146121005 : i32
    %68 = vector.broadcast %c2146121005_i32_21 : i32 to vector<256x128xi32>
    %69 = arith.muli %67, %68 : vector<256x128xi32>
    %c15_i32_22 = arith.constant 15 : i32
    %70 = vector.broadcast %c15_i32_22 : i32 to vector<256x128xi32>
    %71 = arith.shrui %69, %70 : vector<256x128xi32>
    %72 = arith.xori %69, %71 : vector<256x128xi32>
    %c-2073254261_i32_23 = arith.constant -2073254261 : i32
    %73 = vector.broadcast %c-2073254261_i32_23 : i32 to vector<256x128xi32>
    %74 = arith.muli %72, %73 : vector<256x128xi32>
    %c16_i32_24 = arith.constant 16 : i32
    %75 = vector.broadcast %c16_i32_24 : i32 to vector<256x128xi32>
    %76 = arith.shrui %74, %75 : vector<256x128xi32>
    %77 = arith.xori %74, %76 : vector<256x128xi32>
    %c-2147483648_i32_25 = arith.constant -2147483648 : i32
    %78 = vector.broadcast %c-2147483648_i32_25 : i32 to vector<256x128xi32>
    %79 = arith.andi %77, %78 : vector<256x128xi32>
    %c0_i32_26 = arith.constant 0 : i32
    %80 = vector.broadcast %c0_i32_26 : i32 to vector<256x128xi32>
    %81 = arith.cmpi ne, %79, %80 : vector<256x128xi32>
    %cst_27 = arith.constant 2.000000e+00 : f32
    %cst_28 = arith.constant 0.000000e+00 : f32
    %82 = vector.broadcast %cst_27 : f32 to vector<256x128xf32>
    %83 = vector.broadcast %cst_28 : f32 to vector<256x128xf32>
    %84 = arith.select %81, %82, %83 : vector<256x128xi1>, vector<256x128xf32>
    %85 = arith.mulf %51, %84 : vector<256x128xf32>
    %c0_29 = arith.constant 0 : index
    %c0_30 = arith.constant 0 : index
    %86 = vector.load %arg7[%c0_29, %c0_30] : memref<256x128xf32, #tpu.memory_space<vmem>>, vector<256x128xf32>
    tpu.vector_store %arg7[%c0_29, %c0_30], %85 {strides = array<i32>} : memref<256x128xf32, #tpu.memory_space<vmem>>, vector<256x128xf32>,
    return
  }
  func.func @transform_0(%arg0: i32, %arg1: memref<1xi32, #tpu.memory_space<smem>>) -> (i32, i32) {
    %c0_i32 = arith.constant 0 : i32
    %c0_i32_0 = arith.constant 0 : i32
    return %arg0, %c0_i32 : i32, i32
  }
  func.func @transform_1(%arg0: i32, %arg1: memref<1xi32, #tpu.memory_space<smem>>) -> (i32, i32) {
    %c0_i32 = arith.constant 0 : i32
    %c0_i32_0 = arith.constant 0 : i32
    %c0_i32_1 = arith.constant 0 : i32
    return %c0_i32, %c0_i32_0 : i32, i32
  }
  func.func @transform_2(%arg0: i32, %arg1: memref<1xi32, #tpu.memory_space<smem>>) -> (i32, i32) {
    %c0_i32 = arith.constant 0 : i32
    %c0_i32_0 = arith.constant 0 : i32
    %c0_i32_1 = arith.constant 0 : i32
    return %c0_i32, %c0_i32_0 : i32, i32
  }
  func.func @transform_3(%arg0: i32, %arg1: memref<1xi32, #tpu.memory_space<smem>>) -> (i32, i32) {
    %c0_i32 = arith.constant 0 : i32
    %c0_i32_0 = arith.constant 0 : i32
    %c0_i32_1 = arith.constant 0 : i32
    return %c0_i32, %c0_i32_0 : i32, i32
  }
  func.func @transform_4(%arg0: i32, %arg1: memref<1xi32, #tpu.memory_space<smem>>) -> (i32, i32) {
    %c0_i32 = arith.constant 0 : i32
    %c0_i32_0 = arith.constant 0 : i32
    %c0_i32_1 = arith.constant 0 : i32
    return %c0_i32, %c0_i32_0 : i32, i32
  }
  func.func @transform_5(%arg0: i32, %arg1: memref<1xi32, #tpu.memory_space<smem>>) -> (i32, i32) {
    %c0_i32 = arith.constant 0 : i32
    %c0_i32_0 = arith.constant 0 : i32
    return %arg0, %c0_i32 : i32, i32
  }
}

</mosaic_0001>

<llo_original>
// kernel: tpu_custom_call.1
$region0: #{tpu_custom_call.1}
  #allocation0 [shape = 'u32[]', space=smem, size = 0x4, offset = 0x4, fixed_abs, tag = 'smem constant byte address 0x4 - core index']
  #allocation1 [shape = 'u32[144,128]{1,0:T(1,128)}', space=vmem, size = 0x12000, scoped, tag = 'internal scratch']
  #allocation2 [shape = 's32[1]{0}', space=sflag, size = 0x4, scoped, tag = 'scoped memory for tpu_custom_call.1']
  #allocation3 [shape = 's32[1]{0:T(128)S(6)}', space=smem, size = 0x200, scoped, tag = 'prefetched SMEM operand 0']
  %s0 = inlined_call_operand.<no memory space> [shape: s32[1], index: 0, kind: input, shape index: {}]
  %s1 = inlined_call_operand.vmem [shape: bf16[256,32], index: 1, kind: input, shape index: {}]
  %s2 = inlined_call_operand.vmem [shape: bf16[32,256], index: 2, kind: input, shape index: {}]
  %s3 = inlined_call_operand.vmem [shape: f32[1,256], index: 3, kind: input, shape index: {}]
  %s4 = inlined_call_operand.vmem [shape: bf16[256,128], index: 4, kind: input, shape index: {}]
  %s5 = inlined_call_operand.vmem [shape: f32[1,128], index: 5, kind: input, shape index: {}]
  %s6 = inlined_call_operand.hbm [shape: f32[256,128], index: 6, kind: output, shape index: {}]
  %s7 = sld [smem:[#allocation0]]
  $region30: #{tpu_custom_call.1} parent=0
    _
  %s9 = ssub.s32 1, %s7
  %s10 = scalar_select 0, %s9, %s7
  %11 = sst [smem:[#allocation3]] %s0
  $region1: #{tpu_custom_call.1} parent=0
    #allocation4 [shape = 'u8[131072]{0}', space=vmem, size = 0x20000, scoped, tag = 'output window, operand 0, single buffered']
    #allocation5 [shape = 's32[1]{0}', space=sflag, size = 0x4, scoped, tag = 'scoped memory for tpu_custom_call.1']
    %12 = vsyncpa [#allocation5], 0
    // Predicated region
    $region2: #{tpu_custom_call.1} parent=1 // pred_check
      _
    $region3: #{tpu_custom_call.1} parent=1 // pred_check_branch
      %14 = sbr.rel (0) target = $region5
    $region4: #{tpu_custom_call.1} parent=1 // pred_region
      _
    $region5: #{tpu_custom_call.1} parent=1 // pred_fallthru
      _
    // Predicated region
    $region6: #{tpu_custom_call.1} parent=1 // pred_check
      _
    $region7: #{tpu_custom_call.1} parent=1 // pred_check_branch
      %16 = sbr.rel (0) target = $region9
    $region8: #{tpu_custom_call.1} parent=1 // pred_region
      _
    $region9: #{tpu_custom_call.1} parent=1 // pred_fallthru
      _
    // Predicated region
    $region10: #{tpu_custom_call.1} parent=1 // pred_check
      _
    $region11: #{tpu_custom_call.1} parent=1 // pred_check_branch
      %18 = sbr.rel (0) target = $region13
    $region12: #{tpu_custom_call.1} parent=1 // pred_region
      _
    $region13: #{tpu_custom_call.1} parent=1 // pred_fallthru
      _
    // Predicated region
    $region14: #{tpu_custom_call.1} parent=1 // pred_check
      _
    $region15: #{tpu_custom_call.1} parent=1 // pred_check_branch
      %20 = sbr.rel (0) target = $region17
    $region16: #{tpu_custom_call.1} parent=1 // pred_region
      _
    $region17: #{tpu_custom_call.1} parent=1 // pred_fallthru
      _
    // Predicated region
    $region18: #{tpu_custom_call.1} parent=1 // pred_check
      _
    $region19: #{tpu_custom_call.1} parent=1 // pred_check_branch
      %22 = sbr.rel (0) target = $region21
    $region20: #{tpu_custom_call.1} parent=1 // pred_region
      _
    $region21: #{tpu_custom_call.1} parent=1 // pred_fallthru
      _
    %s24 = sld [smem:[#allocation3]]
    %s25 = smul.u32 0, 256
    %v26 = vld [vmem:[%s1] sm:$0xf]
    %v27 = vld [vmem:[%s1 + $0x4] sm:$0xf]
    %v28 = vld [vmem:[%s1 + $0x8] sm:$0xf]
    %v29 = vld [vmem:[%s1 + $0xc] sm:$0xf]
    %v30 = vld [vmem:[%s1 + $0x10] sm:$0xf]
    %v31 = vld [vmem:[%s1 + $0x14] sm:$0xf]
    %v32 = vld [vmem:[%s1 + $0x18] sm:$0xf]
    %v33 = vld [vmem:[%s1 + $0x1c] sm:$0xf]
    %v34 = vld [vmem:[%s1 + $0x20] sm:$0xf]
    %v35 = vld [vmem:[%s1 + $0x24] sm:$0xf]
    %v36 = vld [vmem:[%s1 + $0x28] sm:$0xf]
    %v37 = vld [vmem:[%s1 + $0x2c] sm:$0xf]
    %v38 = vld [vmem:[%s1 + $0x30] sm:$0xf]
    %v39 = vld [vmem:[%s1 + $0x34] sm:$0xf]
    %v40 = vld [vmem:[%s1 + $0x38] sm:$0xf]
    %v41 = vld [vmem:[%s1 + $0x3c] sm:$0xf]
    %v42 = vld [vmem:[%s1 + $0x40] sm:$0xf]
    %v43 = vld [vmem:[%s1 + $0x44] sm:$0xf]
    %v44 = vld [vmem:[%s1 + $0x48] sm:$0xf]
    %v45 = vld [vmem:[%s1 + $0x4c] sm:$0xf]
    %v46 = vld [vmem:[%s1 + $0x50] sm:$0xf]
    %v47 = vld [vmem:[%s1 + $0x54] sm:$0xf]
    %v48 = vld [vmem:[%s1 + $0x58] sm:$0xf]
    %v49 = vld [vmem:[%s1 + $0x5c] sm:$0xf]
    %v50 = vld [vmem:[%s1 + $0x60] sm:$0xf]
    %v51 = vld [vmem:[%s1 + $0x64] sm:$0xf]
    %v52 = vld [vmem:[%s1 + $0x68] sm:$0xf]
    %v53 = vld [vmem:[%s1 + $0x6c] sm:$0xf]
    %v54 = vld [vmem:[%s1 + $0x70] sm:$0xf]
    %v55 = vld [vmem:[%s1 + $0x74] sm:$0xf]
    %v56 = vld [vmem:[%s1 + $0x78] sm:$0xf]
    %v57 = vld [vmem:[%s1 + $0x7c] sm:$0xf]
    %v58 = vld [vmem:[%s2] sm:$0xff]
    %v59 = vld [vmem:[%s2 + $0x8] sm:$0xff]
    %v60 = vld [vmem:[%s2 + $0x10] sm:$0xff]
    %v61 = vld [vmem:[%s2 + $0x18] sm:$0xff]
    %v62 = vld [vmem:[%s3] sm:$0x3]
    %v64 = vlaneseq
    %v65 = vshrl.u32 %v64, 7
    %v66 = vsub.s32 0, %v65
    %v67 = vrot.slane %v62, %v66
    %v68 = vlaneseq
    %v69 = vshrl.u32 %v68, 7
    %v70 = vsub.s32 1, %v69
    %v71 = vrot.slane %v62, %v70
    %v106 = vunpack.c.l.b16 %v26
    %v107 = vunpack.c.l.b16 %v27
    %v108 = vunpack.c.l.b16 %v28
    %v109 = vunpack.c.l.b16 %v29
    %v110 = vunpack.c.l.b16 %v30
    %v111 = vunpack.c.l.b16 %v31
    %v112 = vunpack.c.l.b16 %v32
    %v113 = vunpack.c.l.b16 %v33
    %v114 = vunpack.c.l.b16 %v34
    %v115 = vunpack.c.l.b16 %v35
    %v116 = vunpack.c.l.b16 %v36
    %v117 = vunpack.c.l.b16 %v37
    %v118 = vunpack.c.l.b16 %v38
    %v119 = vunpack.c.l.b16 %v39
    %v120 = vunpack.c.l.b16 %v40
    %v121 = vunpack.c.l.b16 %v41
    %v122 = vunpack.c.l.b16 %v42
    %v123 = vunpack.c.l.b16 %v43
    %v124 = vunpack.c.l.b16 %v44
    %v125 = vunpack.c.l.b16 %v45
    %v126 = vunpack.c.l.b16 %v46
    %v127 = vunpack.c.l.b16 %v47
    %v128 = vunpack.c.l.b16 %v48
    %v129 = vunpack.c.l.b16 %v49
    %v130 = vunpack.c.l.b16 %v50
    %v131 = vunpack.c.l.b16 %v51
    %v132 = vunpack.c.l.b16 %v52
    %v133 = vunpack.c.l.b16 %v53
    %v134 = vunpack.c.l.b16 %v54
    %v135 = vunpack.c.l.b16 %v55
    %v136 = vunpack.c.l.b16 %v56
    %v137 = vunpack.c.l.b16 %v57
    %v138 = vpack.c.b16 %v107, %v106
    %v139 = vpack.c.b16 %v109, %v108
    %v140 = vpack.c.b16 %v111, %v110
    %v141 = vpack.c.b16 %v113, %v112
    %v142 = vpack.c.b16 %v115, %v114
    %v143 = vpack.c.b16 %v117, %v116
    %v144 = vpack.c.b16 %v119, %v118
    %v145 = vpack.c.b16 %v121, %v120
    %v146 = vpack.c.b16 %v123, %v122
    %v147 = vpack.c.b16 %v125, %v124
    %v148 = vpack.c.b16 %v127, %v126
    %v149 = vpack.c.b16 %v129, %v128
    %v150 = vpack.c.b16 %v131, %v130
    %v151 = vpack.c.b16 %v133, %v132
    %v152 = vpack.c.b16 %v135, %v134
    %v153 = vpack.c.b16 %v137, %v136
    %v158 = vunpack.c.l.b16 %v58
    %v159 = vunpack.c.h.b16 %v58
    %v160 = vunpack.c.l.b16 %v59
    %v161 = vunpack.c.h.b16 %v59
    %v162 = vunpack.c.l.b16 %v60
    %v163 = vunpack.c.h.b16 %v60
    %v164 = vunpack.c.l.b16 %v61
    %v165 = vunpack.c.h.b16 %v61
    %v166 = vpack.c.b16 %v160, %v158
    %v167 = vpack.c.b16 %v161, %v159
    %v168 = vpack.c.b16 %v164, %v162
    %v169 = vpack.c.b16 %v165, %v163
    %vm174 = vcmask 261120
    %v176 = vsel %vm174, %v138, 0
    %v179 = vsel %vm174, %v139, 0
    %v182 = vsel %vm174, %v140, 0
    %v185 = vsel %vm174, %v141, 0
    %v188 = vsel %vm174, %v142, 0
    %v191 = vsel %vm174, %v143, 0
    %v194 = vsel %vm174, %v144, 0
    %v197 = vsel %vm174, %v145, 0
    %v200 = vsel %vm174, %v146, 0
    %v203 = vsel %vm174, %v147, 0
    %v206 = vsel %vm174, %v148, 0
    %v209 = vsel %vm174, %v149, 0
    %v212 = vsel %vm174, %v150, 0
    %v215 = vsel %vm174, %v151, 0
    %v218 = vsel %vm174, %v152, 0
    %v221 = vsel %vm174, %v153, 0
    %223 = vmatprep.subr.bf16.mxu0 %v167
    %224 = vmatpush1.bf16.msra.mxu0 %v166
    %225 = vmatprep.subr.bf16.mxu0 %v169
    %226 = vmatpush1.bf16.msra.mxu0 %v168
    %227 = vmatprep.subr.bf16.mxu0 0
    %228 = vmatpush1.bf16.msra.mxu0 0
    %229 = vmatprep.subr.bf16.mxu0 0
    %230 = vmatpush1.bf16.msra.mxu0 0
    %231 = vmatprep.subr.bf16.mxu0 0
    %232 = vmatpush1.bf16.msra.mxu0 0
    %233 = vmatprep.subr.bf16.mxu0 0
    %234 = vmatpush1.bf16.msra.mxu0 0
    %235 = vmatprep.subr.bf16.mxu0 0
    %236 = vmatpush1.bf16.msra.mxu0 0
    %237 = vmatprep.subr.bf16.mxu0 0
    %238 = vmatpush1.bf16.msra.mxu0 0
    %239 = vmatprep.subr.bf16.mxu0 0
    %240 = vmatpush1.bf16.msra.mxu0 0
    %241 = vmatprep.subr.bf16.mxu0 0
    %242 = vmatpush1.bf16.msra.mxu0 0
    %243 = vmatprep.subr.bf16.mxu0 0
    %244 = vmatpush1.bf16.msra.mxu0 0
    %245 = vmatprep.subr.bf16.mxu0 0
    %246 = vmatpush1.bf16.msra.mxu0 0
    %247 = vmatprep.subr.bf16.mxu0 0
    %248 = vmatpush1.bf16.msra.mxu0 0
    %249 = vmatprep.subr.bf16.mxu0 0
    %250 = vmatpush1.bf16.msra.mxu0 0
    %251 = vmatprep.subr.bf16.mxu0 0
    %252 = vmatpush1.bf16.msra.mxu0 0
    %253 = vmatprep.subr.bf16.mxu0 0
    %254 = vmatpush1.bf16.msra.mxu0 0
    %255 = vmatprep.mubr.bf16.mxu0 0
    %256 = vmatmul.mubr.bf16.gmra.mrb[0].mxu0 %v176
    %v257 = vpop.f32.mrb[0].mxu0
    %v258 = vadd.f32 %v67, %v257
    %v259 = vpop.f32.mrb[0].mxu0
    %v260 = vadd.f32 %v71, %v259
    %v261 = vpop.f32.mrb[0].mxu0
    %v262 = vadd.f32 %v67, %v261
    %v263 = vpop.f32.mrb[0].mxu0
    %v264 = vadd.f32 %v71, %v263
    %265 = vmatprep.mubr.bf16.mxu0 0
    %266 = vmatmul.mubr.bf16.gmra.mrb[0].mxu0 %v179
    %v267 = vpop.f32.mrb[0].mxu0
    %v268 = vadd.f32 %v67, %v267
    %v269 = vpop.f32.mrb[0].mxu0
    %v270 = vadd.f32 %v71, %v269
    %v271 = vpop.f32.mrb[0].mxu0
    %v272 = vadd.f32 %v67, %v271
    %v273 = vpop.f32.mrb[0].mxu0
    %v274 = vadd.f32 %v71, %v273
    %275 = vmatprep.mubr.bf16.mxu0 0
    %276 = vmatmul.mubr.bf16.gmra.mrb[0].mxu0 %v182
    %v277 = vpop.f32.mrb[0].mxu0
    %v278 = vadd.f32 %v67, %v277
    %v279 = vpop.f32.mrb[0].mxu0
    %v280 = vadd.f32 %v71, %v279
    %v281 = vpop.f32.mrb[0].mxu0
    %v282 = vadd.f32 %v67, %v281
    %v283 = vpop.f32.mrb[0].mxu0
    %v284 = vadd.f32 %v71, %v283
    %285 = vmatprep.mubr.bf16.mxu0 0
    %286 = vmatmul.mubr.bf16.gmra.mrb[0].mxu0 %v185
    %v287 = vpop.f32.mrb[0].mxu0
    %v288 = vadd.f32 %v67, %v287
    %v289 = vpop.f32.mrb[0].mxu0
    %v290 = vadd.f32 %v71, %v289
    %v291 = vpop.f32.mrb[0].mxu0
    %v292 = vadd.f32 %v67, %v291
    %v293 = vpop.f32.mrb[0].mxu0
    %v294 = vadd.f32 %v71, %v293
    %295 = vmatprep.mubr.bf16.mxu0 0
    %296 = vmatmul.mubr.bf16.gmra.mrb[0].mxu0 %v188
    %v297 = vpop.f32.mrb[0].mxu0
    %v298 = vadd.f32 %v67, %v297
    %v299 = vpop.f32.mrb[0].mxu0
    %v300 = vadd.f32 %v71, %v299
    %v301 = vpop.f32.mrb[0].mxu0
    %v302 = vadd.f32 %v67, %v301
    %v303 = vpop.f32.mrb[0].mxu0
    %v304 = vadd.f32 %v71, %v303
    %305 = vmatprep.mubr.bf16.mxu0 0
    %306 = vmatmul.mubr.bf16.gmra.mrb[0].mxu0 %v191
    %v307 = vpop.f32.mrb[0].mxu0
    %v308 = vadd.f32 %v67, %v307
    %v309 = vpop.f32.mrb[0].mxu0
    %v310 = vadd.f32 %v71, %v309
    %v311 = vpop.f32.mrb[0].mxu0
    %v312 = vadd.f32 %v67, %v311
    %v313 = vpop.f32.mrb[0].mxu0
    %v314 = vadd.f32 %v71, %v313
    %315 = vmatprep.mubr.bf16.mxu0 0
    %316 = vmatmul.mubr.bf16.gmra.mrb[0].mxu0 %v194
    %v317 = vpop.f32.mrb[0].mxu0
    %v318 = vadd.f32 %v67, %v317
    %v319 = vpop.f32.mrb[0].mxu0
    %v320 = vadd.f32 %v71, %v319
    %v321 = vpop.f32.mrb[0].mxu0
    %v322 = vadd.f32 %v67, %v321
    %v323 = vpop.f32.mrb[0].mxu0
    %v324 = vadd.f32 %v71, %v323
    %325 = vmatprep.mubr.bf16.mxu0 0
    %326 = vmatmul.mubr.bf16.gmra.mrb[0].mxu0 %v197
    %v327 = vpop.f32.mrb[0].mxu0
    %v328 = vadd.f32 %v67, %v327
    %v329 = vpop.f32.mrb[0].mxu0
    %v330 = vadd.f32 %v71, %v329
    %v331 = vpop.f32.mrb[0].mxu0
    %v332 = vadd.f32 %v67, %v331
    %v333 = vpop.f32.mrb[0].mxu0
    %v334 = vadd.f32 %v71, %v333
    %335 = vmatprep.mubr.bf16.mxu0 0
    %336 = vmatmul.mubr.bf16.gmra.mrb[0].mxu0 %v200
    %v337 = vpop.f32.mrb[0].mxu0
    %v338 = vadd.f32 %v67, %v337
    %v339 = vpop.f32.mrb[0].mxu0
    %v340 = vadd.f32 %v71, %v339
    %v341 = vpop.f32.mrb[0].mxu0
    %v342 = vadd.f32 %v67, %v341
    %v343 = vpop.f32.mrb[0].mxu0
    %v344 = vadd.f32 %v71, %v343
    %345 = vmatprep.mubr.bf16.mxu0 0
    %346 = vmatmul.mubr.bf16.gmra.mrb[0].mxu0 %v203
    %v347 = vpop.f32.mrb[0].mxu0
    %v348 = vadd.f32 %v67, %v347
    %v349 = vpop.f32.mrb[0].mxu0
    %v350 = vadd.f32 %v71, %v349
    %v351 = vpop.f32.mrb[0].mxu0
    %v352 = vadd.f32 %v67, %v351
    %v353 = vpop.f32.mrb[0].mxu0
    %v354 = vadd.f32 %v71, %v353
    %355 = vmatprep.mubr.bf16.mxu0 0
    %356 = vmatmul.mubr.bf16.gmra.mrb[0].mxu0 %v206
    %v357 = vpop.f32.mrb[0].mxu0
    %v358 = vadd.f32 %v67, %v357
    %v359 = vpop.f32.mrb[0].mxu0
    %v360 = vadd.f32 %v71, %v359
    %v361 = vpop.f32.mrb[0].mxu0
    %v362 = vadd.f32 %v67, %v361
    %v363 = vpop.f32.mrb[0].mxu0
    %v364 = vadd.f32 %v71, %v363
    %365 = vmatprep.mubr.bf16.mxu0 0
    %366 = vmatmul.mubr.bf16.gmra.mrb[0].mxu0 %v209
    %v367 = vpop.f32.mrb[0].mxu0
    %v368 = vadd.f32 %v67, %v367
    %v369 = vpop.f32.mrb[0].mxu0
    %v370 = vadd.f32 %v71, %v369
    %v371 = vpop.f32.mrb[0].mxu0
    %v372 = vadd.f32 %v67, %v371
    %v373 = vpop.f32.mrb[0].mxu0
    %v374 = vadd.f32 %v71, %v373
    %375 = vmatprep.mubr.bf16.mxu0 0
    %376 = vmatmul.mubr.bf16.gmra.mrb[0].mxu0 %v212
    %v377 = vpop.f32.mrb[0].mxu0
    %v378 = vadd.f32 %v67, %v377
    %v379 = vpop.f32.mrb[0].mxu0
    %v380 = vadd.f32 %v71, %v379
    %v381 = vpop.f32.mrb[0].mxu0
    %v382 = vadd.f32 %v67, %v381
    %v383 = vpop.f32.mrb[0].mxu0
    %v384 = vadd.f32 %v71, %v383
    %385 = vmatprep.mubr.bf16.mxu0 0
    %386 = vmatmul.mubr.bf16.gmra.mrb[0].mxu0 %v215
    %v387 = vpop.f32.mrb[0].mxu0
    %v388 = vadd.f32 %v67, %v387
    %v389 = vpop.f32.mrb[0].mxu0
    %v390 = vadd.f32 %v71, %v389
    %v391 = vpop.f32.mrb[0].mxu0
    %v392 = vadd.f32 %v67, %v391
    %v393 = vpop.f32.mrb[0].mxu0
    %v394 = vadd.f32 %v71, %v393
    %395 = vmatprep.mubr.bf16.mxu0 0
    %396 = vmatmul.mubr.bf16.gmra.mrb[0].mxu0 %v218
    %v397 = vpop.f32.mrb[0].mxu0
    %v398 = vadd.f32 %v67, %v397
    %v399 = vpop.f32.mrb[0].mxu0
    %v400 = vadd.f32 %v71, %v399
    %v401 = vpop.f32.mrb[0].mxu0
    %v402 = vadd.f32 %v67, %v401
    %v403 = vpop.f32.mrb[0].mxu0
    %v404 = vadd.f32 %v71, %v403
    %405 = vmatprep.mubr.bf16.mxu0 0
    %406 = vmatmul.mubr.bf16.gmra.mrb[0].mxu0 %v221
    %v407 = vpop.f32.mrb[0].mxu0
    %v408 = vadd.f32 %v67, %v407
    %v409 = vpop.f32.mrb[0].mxu0
    %v410 = vadd.f32 %v71, %v409
    %v411 = vpop.f32.mrb[0].mxu0
    %v412 = vadd.f32 %v67, %v411
    %v413 = vpop.f32.mrb[0].mxu0
    %v414 = vadd.f32 %v71, %v413
    %415 = vdwg.mxu0
    %v416 = vmax.f32 %v258, 0.0
    %v417 = vmax.f32 %v260, 0.0
    %v418 = vmax.f32 %v262, 0.0
    %v419 = vmax.f32 %v264, 0.0
    %v420 = vmax.f32 %v268, 0.0
    %v421 = vmax.f32 %v270, 0.0
    %v422 = vmax.f32 %v272, 0.0
    %v423 = vmax.f32 %v274, 0.0
    %v424 = vmax.f32 %v278, 0.0
    %v425 = vmax.f32 %v280, 0.0
    %v426 = vmax.f32 %v282, 0.0
    %v427 = vmax.f32 %v284, 0.0
    %v428 = vmax.f32 %v288, 0.0
    %v429 = vmax.f32 %v290, 0.0
    %v430 = vmax.f32 %v292, 0.0
    %v431 = vmax.f32 %v294, 0.0
    %v432 = vmax.f32 %v298, 0.0
    %v433 = vmax.f32 %v300, 0.0
    %v434 = vmax.f32 %v302, 0.0
    %v435 = vmax.f32 %v304, 0.0
    %v436 = vmax.f32 %v308, 0.0
    %v437 = vmax.f32 %v310, 0.0
    %v438 = vmax.f32 %v312, 0.0
    %v439 = vmax.f32 %v314, 0.0
    %v440 = vmax.f32 %v318, 0.0
    %v441 = vmax.f32 %v320, 0.0
    %v442 = vmax.f32 %v322, 0.0
    %v443 = vmax.f32 %v324, 0.0
    %v444 = vmax.f32 %v328, 0.0
    %v445 = vmax.f32 %v330, 0.0
    %v446 = vmax.f32 %v332, 0.0
    %v447 = vmax.f32 %v334, 0.0
    %v448 = vmax.f32 %v338, 0.0
    %v449 = vmax.f32 %v340, 0.0
    %v450 = vmax.f32 %v342, 0.0
    %v451 = vmax.f32 %v344, 0.0
    %v452 = vmax.f32 %v348, 0.0
    %v453 = vmax.f32 %v350, 0.0
    %v454 = vmax.f32 %v352, 0.0
    %v455 = vmax.f32 %v354, 0.0
    %v456 = vmax.f32 %v358, 0.0
    %v457 = vmax.f32 %v360, 0.0
    %v458 = vmax.f32 %v362, 0.0
    %v459 = vmax.f32 %v364, 0.0
    %v460 = vmax.f32 %v368, 0.0
    %v461 = vmax.f32 %v370, 0.0
    %v462 = vmax.f32 %v372, 0.0
    %v463 = vmax.f32 %v374, 0.0
    %v464 = vmax.f32 %v378, 0.0
    %v465 = vmax.f32 %v380, 0.0
    %v466 = vmax.f32 %v382, 0.0
    %v467 = vmax.f32 %v384, 0.0
    %v468 = vmax.f32 %v388, 0.0
    %v469 = vmax.f32 %v390, 0.0
    %v470 = vmax.f32 %v392, 0.0
    %v471 = vmax.f32 %v394, 0.0
    %v472 = vmax.f32 %v398, 0.0
    %v473 = vmax.f32 %v400, 0.0
    %v474 = vmax.f32 %v402, 0.0
    %v475 = vmax.f32 %v404, 0.0
    %v476 = vmax.f32 %v408, 0.0
    %v477 = vmax.f32 %v410, 0.0
    %v478 = vmax.f32 %v412, 0.0
    %v479 = vmax.f32 %v414, 0.0
    %v480 = vlaneseq
    %v481 = vshrl.u32 %v480, 7
    %v482 = vadd.s32 %v481, 8
    %v483 = vadd.s32 %v481, 16
    %v484 = vadd.s32 %v481, 24
    %v485 = vadd.s32 %v481, 32
    %v486 = vadd.s32 %v481, 40
    %v487 = vadd.s32 %v481, 48
    %v488 = vadd.s32 %v481, 56
    %v489 = vadd.s32 %v481, 64
    %v490 = vadd.s32 %v481, 72
    %v491 = vadd.s32 %v481, 80
    %v492 = vadd.s32 %v481, 88
    %v493 = vadd.s32 %v481, 96
    %v494 = vadd.s32 %v481, 104
    %v495 = vadd.s32 %v481, 112
    %v496 = vadd.s32 %v481, 120
    %v497 = vadd.s32 %v481, 128
    %v498 = vadd.s32 %v481, 136
    %v499 = vadd.s32 %v481, 144
    %v500 = vadd.s32 %v481, 152
    %v501 = vadd.s32 %v481, 160
    %v502 = vadd.s32 %v481, 168
    %v503 = vadd.s32 %v481, 176
    %v504 = vadd.s32 %v481, 184
    %v505 = vadd.s32 %v481, 192
    %v506 = vadd.s32 %v481, 200
    %v507 = vadd.s32 %v481, 208
    %v508 = vadd.s32 %v481, 216
    %v509 = vadd.s32 %v481, 224
    %v510 = vadd.s32 %v481, 232
    %v511 = vadd.s32 %v481, 240
    %v512 = vadd.s32 %v481, 248
    %v513 = vlaneseq
    %v514 = vand.u32 %v513, 127
    %v515 = vadd.s32 %v514, 128
    %v516 = vstv %s25
    %v517 = vadd.s32 %v481, %v516
    %v518 = vadd.s32 %v482, %v516
    %v519 = vadd.s32 %v483, %v516
    %v520 = vadd.s32 %v484, %v516
    %v521 = vadd.s32 %v485, %v516
    %v522 = vadd.s32 %v486, %v516
    %v523 = vadd.s32 %v487, %v516
    %v524 = vadd.s32 %v488, %v516
    %v525 = vadd.s32 %v489, %v516
    %v526 = vadd.s32 %v490, %v516
    %v527 = vadd.s32 %v491, %v516
    %v528 = vadd.s32 %v492, %v516
    %v529 = vadd.s32 %v493, %v516
    %v530 = vadd.s32 %v494, %v516
    %v531 = vadd.s32 %v495, %v516
    %v532 = vadd.s32 %v496, %v516
    %v533 = vadd.s32 %v497, %v516
    %v534 = vadd.s32 %v498, %v516
    %v535 = vadd.s32 %v499, %v516
    %v536 = vadd.s32 %v500, %v516
    %v537 = vadd.s32 %v501, %v516
    %v538 = vadd.s32 %v502, %v516
    %v539 = vadd.s32 %v503, %v516
    %v540 = vadd.s32 %v504, %v516
    %v541 = vadd.s32 %v505, %v516
    %v542 = vadd.s32 %v506, %v516
    %v543 = vadd.s32 %v507, %v516
    %v544 = vadd.s32 %v508, %v516
    %v545 = vadd.s32 %v509, %v516
    %v546 = vadd.s32 %v510, %v516
    %v547 = vadd.s32 %v511, %v516
    %v548 = vadd.s32 %v512, %v516
    %v549 = vmul.u32 %v517, 2654435769
    %v550 = vmul.u32 %v518, 2654435769
    %v551 = vmul.u32 %v519, 2654435769
    %v552 = vmul.u32 %v520, 2654435769
    %v553 = vmul.u32 %v521, 2654435769
    %v554 = vmul.u32 %v522, 2654435769
    %v555 = vmul.u32 %v523, 2654435769
    %v556 = vmul.u32 %v524, 2654435769
    %v557 = vmul.u32 %v525, 2654435769
    %v558 = vmul.u32 %v526, 2654435769
    %v559 = vmul.u32 %v527, 2654435769
    %v560 = vmul.u32 %v528, 2654435769
    %v561 = vmul.u32 %v529, 2654435769
    %v562 = vmul.u32 %v530, 2654435769
    %v563 = vmul.u32 %v531, 2654435769
    %v564 = vmul.u32 %v532, 2654435769
    %v565 = vmul.u32 %v533, 2654435769
    %v566 = vmul.u32 %v534, 2654435769
    %v567 = vmul.u32 %v535, 2654435769
    %v568 = vmul.u32 %v536, 2654435769
    %v569 = vmul.u32 %v537, 2654435769
    %v570 = vmul.u32 %v538, 2654435769
    %v571 = vmul.u32 %v539, 2654435769
    %v572 = vmul.u32 %v540, 2654435769
    %v573 = vmul.u32 %v541, 2654435769
    %v574 = vmul.u32 %v542, 2654435769
    %v575 = vmul.u32 %v543, 2654435769
    %v576 = vmul.u32 %v544, 2654435769
    %v577 = vmul.u32 %v545, 2654435769
    %v578 = vmul.u32 %v546, 2654435769
    %v579 = vmul.u32 %v547, 2654435769
    %v580 = vmul.u32 %v548, 2654435769
    %v581 = vstv %s24
    %v582 = vadd.s32 %v581, %v549
    %v583 = vadd.s32 %v581, %v550
    %v584 = vadd.s32 %v581, %v551
    %v585 = vadd.s32 %v581, %v552
    %v586 = vadd.s32 %v581, %v553
    %v587 = vadd.s32 %v581, %v554
    %v588 = vadd.s32 %v581, %v555
    %v589 = vadd.s32 %v581, %v556
    %v590 = vadd.s32 %v581, %v557
    %v591 = vadd.s32 %v581, %v558
    %v592 = vadd.s32 %v581, %v559
    %v593 = vadd.s32 %v581, %v560
    %v594 = vadd.s32 %v581, %v561
    %v595 = vadd.s32 %v581, %v562
    %v596 = vadd.s32 %v581, %v563
    %v597 = vadd.s32 %v581, %v564
    %v598 = vadd.s32 %v581, %v565
    %v599 = vadd.s32 %v581, %v566
    %v600 = vadd.s32 %v581, %v567
    %v601 = vadd.s32 %v581, %v568
    %v602 = vadd.s32 %v581, %v569
    %v603 = vadd.s32 %v581, %v570
    %v604 = vadd.s32 %v581, %v571
    %v605 = vadd.s32 %v581, %v572
    %v606 = vadd.s32 %v581, %v573
    %v607 = vadd.s32 %v581, %v574
    %v608 = vadd.s32 %v581, %v575
    %v609 = vadd.s32 %v581, %v576
    %v610 = vadd.s32 %v581, %v577
    %v611 = vadd.s32 %v581, %v578
    %v612 = vadd.s32 %v581, %v579
    %v613 = vadd.s32 %v581, %v580
    %v614 = vmul.u32 %v514, 2246822507
    %v615 = vmul.u32 %v515, 2246822507
    %v616 = vadd.s32 %v582, %v614
    %v617 = vadd.s32 %v582, %v615
    %v618 = vadd.s32 %v583, %v614
    %v619 = vadd.s32 %v583, %v615
    %v620 = vadd.s32 %v584, %v614
    %v621 = vadd.s32 %v584, %v615
    %v622 = vadd.s32 %v585, %v614
    %v623 = vadd.s32 %v585, %v615
    %v624 = vadd.s32 %v586, %v614
    %v625 = vadd.s32 %v586, %v615
    %v626 = vadd.s32 %v587, %v614
    %v627 = vadd.s32 %v587, %v615
    %v628 = vadd.s32 %v588, %v614
    %v629 = vadd.s32 %v588, %v615
    %v630 = vadd.s32 %v589, %v614
    %v631 = vadd.s32 %v589, %v615
    %v632 = vadd.s32 %v590, %v614
    %v633 = vadd.s32 %v590, %v615
    %v634 = vadd.s32 %v591, %v614
    %v635 = vadd.s32 %v591, %v615
    %v636 = vadd.s32 %v592, %v614
    %v637 = vadd.s32 %v592, %v615
    %v638 = vadd.s32 %v593, %v614
    %v639 = vadd.s32 %v593, %v615
    %v640 = vadd.s32 %v594, %v614
    %v641 = vadd.s32 %v594, %v615
    %v642 = vadd.s32 %v595, %v614
    %v643 = vadd.s32 %v595, %v615
    %v644 = vadd.s32 %v596, %v614
    %v645 = vadd.s32 %v596, %v615
    %v646 = vadd.s32 %v597, %v614
    %v647 = vadd.s32 %v597, %v615
    %v648 = vadd.s32 %v598, %v614
    %v649 = vadd.s32 %v598, %v615
    %v650 = vadd.s32 %v599, %v614
    %v651 = vadd.s32 %v599, %v615
    %v652 = vadd.s32 %v600, %v614
    %v653 = vadd.s32 %v600, %v615
    %v654 = vadd.s32 %v601, %v614
    %v655 = vadd.s32 %v601, %v615
    %v656 = vadd.s32 %v602, %v614
    %v657 = vadd.s32 %v602, %v615
    %v658 = vadd.s32 %v603, %v614
    %v659 = vadd.s32 %v603, %v615
    %v660 = vadd.s32 %v604, %v614
    %v661 = vadd.s32 %v604, %v615
    %v662 = vadd.s32 %v605, %v614
    %v663 = vadd.s32 %v605, %v615
    %v664 = vadd.s32 %v606, %v614
    %v665 = vadd.s32 %v606, %v615
    %v666 = vadd.s32 %v607, %v614
    %v667 = vadd.s32 %v607, %v615
    %v668 = vadd.s32 %v608, %v614
    %v669 = vadd.s32 %v608, %v615
    %v670 = vadd.s32 %v609, %v614
    %v671 = vadd.s32 %v609, %v615
    %v672 = vadd.s32 %v610, %v614
    %v673 = vadd.s32 %v610, %v615
    %v674 = vadd.s32 %v611, %v614
    %v675 = vadd.s32 %v611, %v615
    %v676 = vadd.s32 %v612, %v614
    %v677 = vadd.s32 %v612, %v615
    %v678 = vadd.s32 %v613, %v614
    %v679 = vadd.s32 %v613, %v615
    %v680 = vshrl.u32 %v616, 16
    %v681 = vshrl.u32 %v617, 16
    %v682 = vshrl.u32 %v618, 16
    %v683 = vshrl.u32 %v619, 16
    %v684 = vshrl.u32 %v620, 16
    %v685 = vshrl.u32 %v621, 16
    %v686 = vshrl.u32 %v622, 16
    %v687 = vshrl.u32 %v623, 16
    %v688 = vshrl.u32 %v624, 16
    %v689 = vshrl.u32 %v625, 16
    %v690 = vshrl.u32 %v626, 16
    %v691 = vshrl.u32 %v627, 16
    %v692 = vshrl.u32 %v628, 16
    %v693 = vshrl.u32 %v629, 16
    %v694 = vshrl.u32 %v630, 16
    %v695 = vshrl.u32 %v631, 16
    %v696 = vshrl.u32 %v632, 16
    %v697 = vshrl.u32 %v633, 16
    %v698 = vshrl.u32 %v634, 16
    %v699 = vshrl.u32 %v635, 16
    %v700 = vshrl.u32 %v636, 16
    %v701 = vshrl.u32 %v637, 16
    %v702 = vshrl.u32 %v638, 16
    %v703 = vshrl.u32 %v639, 16
    %v704 = vshrl.u32 %v640, 16
    %v705 = vshrl.u32 %v641, 16
    %v706 = vshrl.u32 %v642, 16
    %v707 = vshrl.u32 %v643, 16
    %v708 = vshrl.u32 %v644, 16
    %v709 = vshrl.u32 %v645, 16
    %v710 = vshrl.u32 %v646, 16
    %v711 = vshrl.u32 %v647, 16
    %v712 = vshrl.u32 %v648, 16
    %v713 = vshrl.u32 %v649, 16
    %v714 = vshrl.u32 %v650, 16
    %v715 = vshrl.u32 %v651, 16
    %v716 = vshrl.u32 %v652, 16
    %v717 = vshrl.u32 %v653, 16
    %v718 = vshrl.u32 %v654, 16
    %v719 = vshrl.u32 %v655, 16
    %v720 = vshrl.u32 %v656, 16
    %v721 = vshrl.u32 %v657, 16
    %v722 = vshrl.u32 %v658, 16
    %v723 = vshrl.u32 %v659, 16
    %v724 = vshrl.u32 %v660, 16
    %v725 = vshrl.u32 %v661, 16
    %v726 = vshrl.u32 %v662, 16
    %v727 = vshrl.u32 %v663, 16
    %v728 = vshrl.u32 %v664, 16
    %v729 = vshrl.u32 %v665, 16
    %v730 = vshrl.u32 %v666, 16
    %v731 = vshrl.u32 %v667, 16
    %v732 = vshrl.u32 %v668, 16
    %v733 = vshrl.u32 %v669, 16
    %v734 = vshrl.u32 %v670, 16
    %v735 = vshrl.u32 %v671, 16
    %v736 = vshrl.u32 %v672, 16
    %v737 = vshrl.u32 %v673, 16
    %v738 = vshrl.u32 %v674, 16
    %v739 = vshrl.u32 %v675, 16
    %v740 = vshrl.u32 %v676, 16
    %v741 = vshrl.u32 %v677, 16
    %v742 = vshrl.u32 %v678, 16
    %v743 = vshrl.u32 %v679, 16
    %v744 = vxor.u32 %v616, %v680
    %v745 = vxor.u32 %v617, %v681
    %v746 = vxor.u32 %v618, %v682
    %v747 = vxor.u32 %v619, %v683
    %v748 = vxor.u32 %v620, %v684
    %v749 = vxor.u32 %v621, %v685
    %v750 = vxor.u32 %v622, %v686
    %v751 = vxor.u32 %v623, %v687
    %v752 = vxor.u32 %v624, %v688
    %v753 = vxor.u32 %v625, %v689
    %v754 = vxor.u32 %v626, %v690
    %v755 = vxor.u32 %v627, %v691
    %v756 = vxor.u32 %v628, %v692
    %v757 = vxor.u32 %v629, %v693
    %v758 = vxor.u32 %v630, %v694
    %v759 = vxor.u32 %v631, %v695
    %v760 = vxor.u32 %v632, %v696
    %v761 = vxor.u32 %v633, %v697
    %v762 = vxor.u32 %v634, %v698
    %v763 = vxor.u32 %v635, %v699
    %v764 = vxor.u32 %v636, %v700
    %v765 = vxor.u32 %v637, %v701
    %v766 = vxor.u32 %v638, %v702
    %v767 = vxor.u32 %v639, %v703
    %v768 = vxor.u32 %v640, %v704
    %v769 = vxor.u32 %v641, %v705
    %v770 = vxor.u32 %v642, %v706
    %v771 = vxor.u32 %v643, %v707
    %v772 = vxor.u32 %v644, %v708
    %v773 = vxor.u32 %v645, %v709
    %v774 = vxor.u32 %v646, %v710
    %v775 = vxor.u32 %v647, %v711
    %v776 = vxor.u32 %v648, %v712
    %v777 = vxor.u32 %v649, %v713
    %v778 = vxor.u32 %v650, %v714
    %v779 = vxor.u32 %v651, %v715
    %v780 = vxor.u32 %v652, %v716
    %v781 = vxor.u32 %v653, %v717
    %v782 = vxor.u32 %v654, %v718
    %v783 = vxor.u32 %v655, %v719
    %v784 = vxor.u32 %v656, %v720
    %v785 = vxor.u32 %v657, %v721
    %v786 = vxor.u32 %v658, %v722
    %v787 = vxor.u32 %v659, %v723
    %v788 = vxor.u32 %v660, %v724
    %v789 = vxor.u32 %v661, %v725
    %v790 = vxor.u32 %v662, %v726
    %v791 = vxor.u32 %v663, %v727
    %v792 = vxor.u32 %v664, %v728
    %v793 = vxor.u32 %v665, %v729
    %v794 = vxor.u32 %v666, %v730
    %v795 = vxor.u32 %v667, %v731
    %v796 = vxor.u32 %v668, %v732
    %v797 = vxor.u32 %v669, %v733
    %v798 = vxor.u32 %v670, %v734
    %v799 = vxor.u32 %v671, %v735
    %v800 = vxor.u32 %v672, %v736
    %v801 = vxor.u32 %v673, %v737
    %v802 = vxor.u32 %v674, %v738
    %v803 = vxor.u32 %v675, %v739
    %v804 = vxor.u32 %v676, %v740
    %v805 = vxor.u32 %v677, %v741
    %v806 = vxor.u32 %v678, %v742
    %v807 = vxor.u32 %v679, %v743
    %v808 = vmul.u32 %v744, 2146121005
    %v809 = vmul.u32 %v745, 2146121005
    %v810 = vmul.u32 %v746, 2146121005
    %v811 = vmul.u32 %v747, 2146121005
    %v812 = vmul.u32 %v748, 2146121005
    %v813 = vmul.u32 %v749, 2146121005
    %v814 = vmul.u32 %v750, 2146121005
    %v815 = vmul.u32 %v751, 2146121005
    %v816 = vmul.u32 %v752, 2146121005
    %v817 = vmul.u32 %v753, 2146121005
    %v818 = vmul.u32 %v754, 2146121005
    %v819 = vmul.u32 %v755, 2146121005
    %v820 = vmul.u32 %v756, 2146121005
    %v821 = vmul.u32 %v757, 2146121005
    %v822 = vmul.u32 %v758, 2146121005
    %v823 = vmul.u32 %v759, 2146121005
    %v824 = vmul.u32 %v760, 2146121005
    %v825 = vmul.u32 %v761, 2146121005
    %v826 = vmul.u32 %v762, 2146121005
    %v827 = vmul.u32 %v763, 2146121005
    %v828 = vmul.u32 %v764, 2146121005
    %v829 = vmul.u32 %v765, 2146121005
    %v830 = vmul.u32 %v766, 2146121005
    %v831 = vmul.u32 %v767, 2146121005
    %v832 = vmul.u32 %v768, 2146121005
    %v833 = vmul.u32 %v769, 2146121005
    %v834 = vmul.u32 %v770, 2146121005
    %v835 = vmul.u32 %v771, 2146121005
    %v836 = vmul.u32 %v772, 2146121005
    %v837 = vmul.u32 %v773, 2146121005
    %v838 = vmul.u32 %v774, 2146121005
    %v839 = vmul.u32 %v775, 2146121005
    %v840 = vmul.u32 %v776, 2146121005
    %v841 = vmul.u32 %v777, 2146121005
    %v842 = vmul.u32 %v778, 2146121005
    %v843 = vmul.u32 %v779, 2146121005
    %v844 = vmul.u32 %v780, 2146121005
    %v845 = vmul.u32 %v781, 2146121005
    %v846 = vmul.u32 %v782, 2146121005
    %v847 = vmul.u32 %v783, 2146121005
    %v848 = vmul.u32 %v784, 2146121005
    %v849 = vmul.u32 %v785, 2146121005
    %v850 = vmul.u32 %v786, 2146121005
    %v851 = vmul.u32 %v787, 2146121005
    %v852 = vmul.u32 %v788, 2146121005
    %v853 = vmul.u32 %v789, 2146121005
    %v854 = vmul.u32 %v790, 2146121005
    %v855 = vmul.u32 %v791, 2146121005
    %v856 = vmul.u32 %v792, 2146121005
    %v857 = vmul.u32 %v793, 2146121005
    %v858 = vmul.u32 %v794, 2146121005
    %v859 = vmul.u32 %v795, 2146121005
    %v860 = vmul.u32 %v796, 2146121005
    %v861 = vmul.u32 %v797, 2146121005
    %v862 = vmul.u32 %v798, 2146121005
    %v863 = vmul.u32 %v799, 2146121005
    %v864 = vmul.u32 %v800, 2146121005
    %v865 = vmul.u32 %v801, 2146121005
    %v866 = vmul.u32 %v802, 2146121005
    %v867 = vmul.u32 %v803, 2146121005
    %v868 = vmul.u32 %v804, 2146121005
    %v869 = vmul.u32 %v805, 2146121005
    %v870 = vmul.u32 %v806, 2146121005
    %v871 = vmul.u32 %v807, 2146121005
    %v872 = vshrl.u32 %v808, 15
    %v873 = vshrl.u32 %v809, 15
    %v874 = vshrl.u32 %v810, 15
    %v875 = vshrl.u32 %v811, 15
    %v876 = vshrl.u32 %v812, 15
    %v877 = vshrl.u32 %v813, 15
    %v878 = vshrl.u32 %v814, 15
    %v879 = vshrl.u32 %v815, 15
    %v880 = vshrl.u32 %v816, 15
    %v881 = vshrl.u32 %v817, 15
    %v882 = vshrl.u32 %v818, 15
    %v883 = vshrl.u32 %v819, 15
    %v884 = vshrl.u32 %v820, 15
    %v885 = vshrl.u32 %v821, 15
    %v886 = vshrl.u32 %v822, 15
    %v887 = vshrl.u32 %v823, 15
    %v888 = vshrl.u32 %v824, 15
    %v889 = vshrl.u32 %v825, 15
    %v890 = vshrl.u32 %v826, 15
    %v891 = vshrl.u32 %v827, 15
    %v892 = vshrl.u32 %v828, 15
    %v893 = vshrl.u32 %v829, 15
    %v894 = vshrl.u32 %v830, 15
    %v895 = vshrl.u32 %v831, 15
    %v896 = vshrl.u32 %v832, 15
    %v897 = vshrl.u32 %v833, 15
    %v898 = vshrl.u32 %v834, 15
    %v899 = vshrl.u32 %v835, 15
    %v900 = vshrl.u32 %v836, 15
    %v901 = vshrl.u32 %v837, 15
    %v902 = vshrl.u32 %v838, 15
    %v903 = vshrl.u32 %v839, 15
    %v904 = vshrl.u32 %v840, 15
    %v905 = vshrl.u32 %v841, 15
    %v906 = vshrl.u32 %v842, 15
    %v907 = vshrl.u32 %v843, 15
    %v908 = vshrl.u32 %v844, 15
    %v909 = vshrl.u32 %v845, 15
    %v910 = vshrl.u32 %v846, 15
    %v911 = vshrl.u32 %v847, 15
    %v912 = vshrl.u32 %v848, 15
    %v913 = vshrl.u32 %v849, 15
    %v914 = vshrl.u32 %v850, 15
    %v915 = vshrl.u32 %v851, 15
    %v916 = vshrl.u32 %v852, 15
    %v917 = vshrl.u32 %v853, 15
    %v918 = vshrl.u32 %v854, 15
    %v919 = vshrl.u32 %v855, 15
    %v920 = vshrl.u32 %v856, 15
    %v921 = vshrl.u32 %v857, 15
    %v922 = vshrl.u32 %v858, 15
    %v923 = vshrl.u32 %v859, 15
    %v924 = vshrl.u32 %v860, 15
    %v925 = vshrl.u32 %v861, 15
    %v926 = vshrl.u32 %v862, 15
    %v927 = vshrl.u32 %v863, 15
    %v928 = vshrl.u32 %v864, 15
    %v929 = vshrl.u32 %v865, 15
    %v930 = vshrl.u32 %v866, 15
    %v931 = vshrl.u32 %v867, 15
    %v932 = vshrl.u32 %v868, 15
    %v933 = vshrl.u32 %v869, 15
    %v934 = vshrl.u32 %v870, 15
    %v935 = vshrl.u32 %v871, 15
    %v936 = vxor.u32 %v808, %v872
    %v937 = vxor.u32 %v809, %v873
    %v938 = vxor.u32 %v810, %v874
    %v939 = vxor.u32 %v811, %v875
    %v940 = vxor.u32 %v812, %v876
    %v941 = vxor.u32 %v813, %v877
    %v942 = vxor.u32 %v814, %v878
    %v943 = vxor.u32 %v815, %v879
    %v944 = vxor.u32 %v816, %v880
    %v945 = vxor.u32 %v817, %v881
    %v946 = vxor.u32 %v818, %v882
    %v947 = vxor.u32 %v819, %v883
    %v948 = vxor.u32 %v820, %v884
    %v949 = vxor.u32 %v821, %v885
    %v950 = vxor.u32 %v822, %v886
    %v951 = vxor.u32 %v823, %v887
    %v952 = vxor.u32 %v824, %v888
    %v953 = vxor.u32 %v825, %v889
    %v954 = vxor.u32 %v826, %v890
    %v955 = vxor.u32 %v827, %v891
    %v956 = vxor.u32 %v828, %v892
    %v957 = vxor.u32 %v829, %v893
    %v958 = vxor.u32 %v830, %v894
    %v959 = vxor.u32 %v831, %v895
    %v960 = vxor.u32 %v832, %v896
    %v961 = vxor.u32 %v833, %v897
    %v962 = vxor.u32 %v834, %v898
    %v963 = vxor.u32 %v835, %v899
    %v964 = vxor.u32 %v836, %v900
    %v965 = vxor.u32 %v837, %v901
    %v966 = vxor.u32 %v838, %v902
    %v967 = vxor.u32 %v839, %v903
    %v968 = vxor.u32 %v840, %v904
    %v969 = vxor.u32 %v841, %v905
    %v970 = vxor.u32 %v842, %v906
    %v971 = vxor.u32 %v843, %v907
    %v972 = vxor.u32 %v844, %v908
    %v973 = vxor.u32 %v845, %v909
    %v974 = vxor.u32 %v846, %v910
    %v975 = vxor.u32 %v847, %v911
    %v976 = vxor.u32 %v848, %v912
    %v977 = vxor.u32 %v849, %v913
    %v978 = vxor.u32 %v850, %v914
    %v979 = vxor.u32 %v851, %v915
    %v980 = vxor.u32 %v852, %v916
    %v981 = vxor.u32 %v853, %v917
    %v982 = vxor.u32 %v854, %v918
    %v983 = vxor.u32 %v855, %v919
    %v984 = vxor.u32 %v856, %v920
    %v985 = vxor.u32 %v857, %v921
    %v986 = vxor.u32 %v858, %v922
    %v987 = vxor.u32 %v859, %v923
    %v988 = vxor.u32 %v860, %v924
    %v989 = vxor.u32 %v861, %v925
    %v990 = vxor.u32 %v862, %v926
    %v991 = vxor.u32 %v863, %v927
    %v992 = vxor.u32 %v864, %v928
    %v993 = vxor.u32 %v865, %v929
    %v994 = vxor.u32 %v866, %v930
    %v995 = vxor.u32 %v867, %v931
    %v996 = vxor.u32 %v868, %v932
    %v997 = vxor.u32 %v869, %v933
    %v998 = vxor.u32 %v870, %v934
    %v999 = vxor.u32 %v871, %v935
    %v1000 = vmul.u32 %v936, 2221713035
    %v1001 = vmul.u32 %v937, 2221713035
    %v1002 = vmul.u32 %v938, 2221713035
    %v1003 = vmul.u32 %v939, 2221713035
    %v1004 = vmul.u32 %v940, 2221713035
    %v1005 = vmul.u32 %v941, 2221713035
    %v1006 = vmul.u32 %v942, 2221713035
    %v1007 = vmul.u32 %v943, 2221713035
    %v1008 = vmul.u32 %v944, 2221713035
    %v1009 = vmul.u32 %v945, 2221713035
    %v1010 = vmul.u32 %v946, 2221713035
    %v1011 = vmul.u32 %v947, 2221713035
    %v1012 = vmul.u32 %v948, 2221713035
    %v1013 = vmul.u32 %v949, 2221713035
    %v1014 = vmul.u32 %v950, 2221713035
    %v1015 = vmul.u32 %v951, 2221713035
    %v1016 = vmul.u32 %v952, 2221713035
    %v1017 = vmul.u32 %v953, 2221713035
    %v1018 = vmul.u32 %v954, 2221713035
    %v1019 = vmul.u32 %v955, 2221713035
    %v1020 = vmul.u32 %v956, 2221713035
    %v1021 = vmul.u32 %v957, 2221713035
    %v1022 = vmul.u32 %v958, 2221713035
    %v1023 = vmul.u32 %v959, 2221713035
    %v1024 = vmul.u32 %v960, 2221713035
    %v1025 = vmul.u32 %v961, 2221713035
    %v1026 = vmul.u32 %v962, 2221713035
    %v1027 = vmul.u32 %v963, 2221713035
    %v1028 = vmul.u32 %v964, 2221713035
    %v1029 = vmul.u32 %v965, 2221713035
    %v1030 = vmul.u32 %v966, 2221713035
    %v1031 = vmul.u32 %v967, 2221713035
    %v1032 = vmul.u32 %v968, 2221713035
    %v1033 = vmul.u32 %v969, 2221713035
    %v1034 = vmul.u32 %v970, 2221713035
    %v1035 = vmul.u32 %v971, 2221713035
    %v1036 = vmul.u32 %v972, 2221713035
    %v1037 = vmul.u32 %v973, 2221713035
    %v1038 = vmul.u32 %v974, 2221713035
    %v1039 = vmul.u32 %v975, 2221713035
    %v1040 = vmul.u32 %v976, 2221713035
    %v1041 = vmul.u32 %v977, 2221713035
    %v1042 = vmul.u32 %v978, 2221713035
    %v1043 = vmul.u32 %v979, 2221713035
    %v1044 = vmul.u32 %v980, 2221713035
    %v1045 = vmul.u32 %v981, 2221713035
    %v1046 = vmul.u32 %v982, 2221713035
    %v1047 = vmul.u32 %v983, 2221713035
    %v1048 = vmul.u32 %v984, 2221713035
    %v1049 = vmul.u32 %v985, 2221713035
    %v1050 = vmul.u32 %v986, 2221713035
    %v1051 = vmul.u32 %v987, 2221713035
    %v1052 = vmul.u32 %v988, 2221713035
    %v1053 = vmul.u32 %v989, 2221713035
    %v1054 = vmul.u32 %v990, 2221713035
    %v1055 = vmul.u32 %v991, 2221713035
    %v1056 = vmul.u32 %v992, 2221713035
    %v1057 = vmul.u32 %v993, 2221713035
    %v1058 = vmul.u32 %v994, 2221713035
    %v1059 = vmul.u32 %v995, 2221713035
    %v1060 = vmul.u32 %v996, 2221713035
    %v1061 = vmul.u32 %v997, 2221713035
    %v1062 = vmul.u32 %v998, 2221713035
    %v1063 = vmul.u32 %v999, 2221713035
    %v1064 = vshrl.u32 %v1000, 16
    %v1065 = vshrl.u32 %v1001, 16
    %v1066 = vshrl.u32 %v1002, 16
    %v1067 = vshrl.u32 %v1003, 16
    %v1068 = vshrl.u32 %v1004, 16
    %v1069 = vshrl.u32 %v1005, 16
    %v1070 = vshrl.u32 %v1006, 16
    %v1071 = vshrl.u32 %v1007, 16
    %v1072 = vshrl.u32 %v1008, 16
    %v1073 = vshrl.u32 %v1009, 16
    %v1074 = vshrl.u32 %v1010, 16
    %v1075 = vshrl.u32 %v1011, 16
    %v1076 = vshrl.u32 %v1012, 16
    %v1077 = vshrl.u32 %v1013, 16
    %v1078 = vshrl.u32 %v1014, 16
    %v1079 = vshrl.u32 %v1015, 16
    %v1080 = vshrl.u32 %v1016, 16
    %v1081 = vshrl.u32 %v1017, 16
    %v1082 = vshrl.u32 %v1018, 16
    %v1083 = vshrl.u32 %v1019, 16
    %v1084 = vshrl.u32 %v1020, 16
    %v1085 = vshrl.u32 %v1021, 16
    %v1086 = vshrl.u32 %v1022, 16
    %v1087 = vshrl.u32 %v1023, 16
    %v1088 = vshrl.u32 %v1024, 16
    %v1089 = vshrl.u32 %v1025, 16
    %v1090 = vshrl.u32 %v1026, 16
    %v1091 = vshrl.u32 %v1027, 16
    %v1092 = vshrl.u32 %v1028, 16
    %v1093 = vshrl.u32 %v1029, 16
    %v1094 = vshrl.u32 %v1030, 16
    %v1095 = vshrl.u32 %v1031, 16
    %v1096 = vshrl.u32 %v1032, 16
    %v1097 = vshrl.u32 %v1033, 16
    %v1098 = vshrl.u32 %v1034, 16
    %v1099 = vshrl.u32 %v1035, 16
    %v1100 = vshrl.u32 %v1036, 16
    %v1101 = vshrl.u32 %v1037, 16
    %v1102 = vshrl.u32 %v1038, 16
    %v1103 = vshrl.u32 %v1039, 16
    %v1104 = vshrl.u32 %v1040, 16
    %v1105 = vshrl.u32 %v1041, 16
    %v1106 = vshrl.u32 %v1042, 16
    %v1107 = vshrl.u32 %v1043, 16
    %v1108 = vshrl.u32 %v1044, 16
    %v1109 = vshrl.u32 %v1045, 16
    %v1110 = vshrl.u32 %v1046, 16
    %v1111 = vshrl.u32 %v1047, 16
    %v1112 = vshrl.u32 %v1048, 16
    %v1113 = vshrl.u32 %v1049, 16
    %v1114 = vshrl.u32 %v1050, 16
    %v1115 = vshrl.u32 %v1051, 16
    %v1116 = vshrl.u32 %v1052, 16
    %v1117 = vshrl.u32 %v1053, 16
    %v1118 = vshrl.u32 %v1054, 16
    %v1119 = vshrl.u32 %v1055, 16
    %v1120 = vshrl.u32 %v1056, 16
    %v1121 = vshrl.u32 %v1057, 16
    %v1122 = vshrl.u32 %v1058, 16
    %v1123 = vshrl.u32 %v1059, 16
    %v1124 = vshrl.u32 %v1060, 16
    %v1125 = vshrl.u32 %v1061, 16
    %v1126 = vshrl.u32 %v1062, 16
    %v1127 = vshrl.u32 %v1063, 16
    %v1128 = vxor.u32 %v1000, %v1064
    %v1129 = vxor.u32 %v1001, %v1065
    %v1130 = vxor.u32 %v1002, %v1066
    %v1131 = vxor.u32 %v1003, %v1067
    %v1132 = vxor.u32 %v1004, %v1068
    %v1133 = vxor.u32 %v1005, %v1069
    %v1134 = vxor.u32 %v1006, %v1070
    %v1135 = vxor.u32 %v1007, %v1071
    %v1136 = vxor.u32 %v1008, %v1072
    %v1137 = vxor.u32 %v1009, %v1073
    %v1138 = vxor.u32 %v1010, %v1074
    %v1139 = vxor.u32 %v1011, %v1075
    %v1140 = vxor.u32 %v1012, %v1076
    %v1141 = vxor.u32 %v1013, %v1077
    %v1142 = vxor.u32 %v1014, %v1078
    %v1143 = vxor.u32 %v1015, %v1079
    %v1144 = vxor.u32 %v1016, %v1080
    %v1145 = vxor.u32 %v1017, %v1081
    %v1146 = vxor.u32 %v1018, %v1082
    %v1147 = vxor.u32 %v1019, %v1083
    %v1148 = vxor.u32 %v1020, %v1084
    %v1149 = vxor.u32 %v1021, %v1085
    %v1150 = vxor.u32 %v1022, %v1086
    %v1151 = vxor.u32 %v1023, %v1087
    %v1152 = vxor.u32 %v1024, %v1088
    %v1153 = vxor.u32 %v1025, %v1089
    %v1154 = vxor.u32 %v1026, %v1090
    %v1155 = vxor.u32 %v1027, %v1091
    %v1156 = vxor.u32 %v1028, %v1092
    %v1157 = vxor.u32 %v1029, %v1093
    %v1158 = vxor.u32 %v1030, %v1094
    %v1159 = vxor.u32 %v1031, %v1095
    %v1160 = vxor.u32 %v1032, %v1096
    %v1161 = vxor.u32 %v1033, %v1097
    %v1162 = vxor.u32 %v1034, %v1098
    %v1163 = vxor.u32 %v1035, %v1099
    %v1164 = vxor.u32 %v1036, %v1100
    %v1165 = vxor.u32 %v1037, %v1101
    %v1166 = vxor.u32 %v1038, %v1102
    %v1167 = vxor.u32 %v1039, %v1103
    %v1168 = vxor.u32 %v1040, %v1104
    %v1169 = vxor.u32 %v1041, %v1105
    %v1170 = vxor.u32 %v1042, %v1106
    %v1171 = vxor.u32 %v1043, %v1107
    %v1172 = vxor.u32 %v1044, %v1108
    %v1173 = vxor.u32 %v1045, %v1109
    %v1174 = vxor.u32 %v1046, %v1110
    %v1175 = vxor.u32 %v1047, %v1111
    %v1176 = vxor.u32 %v1048, %v1112
    %v1177 = vxor.u32 %v1049, %v1113
    %v1178 = vxor.u32 %v1050, %v1114
    %v1179 = vxor.u32 %v1051, %v1115
    %v1180 = vxor.u32 %v1052, %v1116
    %v1181 = vxor.u32 %v1053, %v1117
    %v1182 = vxor.u32 %v1054, %v1118
    %v1183 = vxor.u32 %v1055, %v1119
    %v1184 = vxor.u32 %v1056, %v1120
    %v1185 = vxor.u32 %v1057, %v1121
    %v1186 = vxor.u32 %v1058, %v1122
    %v1187 = vxor.u32 %v1059, %v1123
    %v1188 = vxor.u32 %v1060, %v1124
    %v1189 = vxor.u32 %v1061, %v1125
    %v1190 = vxor.u32 %v1062, %v1126
    %v1191 = vxor.u32 %v1063, %v1127
    %v1192 = vand.u32 %v1128, 2147483648
    %v1193 = vand.u32 %v1129, 2147483648
    %v1194 = vand.u32 %v1130, 2147483648
    %v1195 = vand.u32 %v1131, 2147483648
    %v1196 = vand.u32 %v1132, 2147483648
    %v1197 = vand.u32 %v1133, 2147483648
    %v1198 = vand.u32 %v1134, 2147483648
    %v1199 = vand.u32 %v1135, 2147483648
    %v1200 = vand.u32 %v1136, 2147483648
    %v1201 = vand.u32 %v1137, 2147483648
    %v1202 = vand.u32 %v1138, 2147483648
    %v1203 = vand.u32 %v1139, 2147483648
    %v1204 = vand.u32 %v1140, 2147483648
    %v1205 = vand.u32 %v1141, 2147483648
    %v1206 = vand.u32 %v1142, 2147483648
    %v1207 = vand.u32 %v1143, 2147483648
    %v1208 = vand.u32 %v1144, 2147483648
    %v1209 = vand.u32 %v1145, 2147483648
    %v1210 = vand.u32 %v1146, 2147483648
    %v1211 = vand.u32 %v1147, 2147483648
    %v1212 = vand.u32 %v1148, 2147483648
    %v1213 = vand.u32 %v1149, 2147483648
    %v1214 = vand.u32 %v1150, 2147483648
    %v1215 = vand.u32 %v1151, 2147483648
    %v1216 = vand.u32 %v1152, 2147483648
    %v1217 = vand.u32 %v1153, 2147483648
    %v1218 = vand.u32 %v1154, 2147483648
    %v1219 = vand.u32 %v1155, 2147483648
    %v1220 = vand.u32 %v1156, 2147483648
    %v1221 = vand.u32 %v1157, 2147483648
    %v1222 = vand.u32 %v1158, 2147483648
    %v1223 = vand.u32 %v1159, 2147483648
    %v1224 = vand.u32 %v1160, 2147483648
    %v1225 = vand.u32 %v1161, 2147483648
    %v1226 = vand.u32 %v1162, 2147483648
    %v1227 = vand.u32 %v1163, 2147483648
    %v1228 = vand.u32 %v1164, 2147483648
    %v1229 = vand.u32 %v1165, 2147483648
    %v1230 = vand.u32 %v1166, 2147483648
    %v1231 = vand.u32 %v1167, 2147483648
    %v1232 = vand.u32 %v1168, 2147483648
    %v1233 = vand.u32 %v1169, 2147483648
    %v1234 = vand.u32 %v1170, 2147483648
    %v1235 = vand.u32 %v1171, 2147483648
    %v1236 = vand.u32 %v1172, 2147483648
    %v1237 = vand.u32 %v1173, 2147483648
    %v1238 = vand.u32 %v1174, 2147483648
    %v1239 = vand.u32 %v1175, 2147483648
    %v1240 = vand.u32 %v1176, 2147483648
    %v1241 = vand.u32 %v1177, 2147483648
    %v1242 = vand.u32 %v1178, 2147483648
    %v1243 = vand.u32 %v1179, 2147483648
    %v1244 = vand.u32 %v1180, 2147483648
    %v1245 = vand.u32 %v1181, 2147483648
    %v1246 = vand.u32 %v1182, 2147483648
    %v1247 = vand.u32 %v1183, 2147483648
    %v1248 = vand.u32 %v1184, 2147483648
    %v1249 = vand.u32 %v1185, 2147483648
    %v1250 = vand.u32 %v1186, 2147483648
    %v1251 = vand.u32 %v1187, 2147483648
    %v1252 = vand.u32 %v1188, 2147483648
    %v1253 = vand.u32 %v1189, 2147483648
    %v1254 = vand.u32 %v1190, 2147483648
    %v1255 = vand.u32 %v1191, 2147483648
    %vm1256 = vcmp.ne.s32.totalorder %v1192, 0
    %vm1257 = vcmp.ne.s32.totalorder %v1193, 0
    %vm1258 = vcmp.ne.s32.totalorder %v1194, 0
    %vm1259 = vcmp.ne.s32.totalorder %v1195, 0
    %vm1260 = vcmp.ne.s32.totalorder %v1196, 0
    %vm1261 = vcmp.ne.s32.totalorder %v1197, 0
    %vm1262 = vcmp.ne.s32.totalorder %v1198, 0
    %vm1263 = vcmp.ne.s32.totalorder %v1199, 0
    %vm1264 = vcmp.ne.s32.totalorder %v1200, 0
    %vm1265 = vcmp.ne.s32.totalorder %v1201, 0
    %vm1266 = vcmp.ne.s32.totalorder %v1202, 0
    %vm1267 = vcmp.ne.s32.totalorder %v1203, 0
    %vm1268 = vcmp.ne.s32.totalorder %v1204, 0
    %vm1269 = vcmp.ne.s32.totalorder %v1205, 0
    %vm1270 = vcmp.ne.s32.totalorder %v1206, 0
    %vm1271 = vcmp.ne.s32.totalorder %v1207, 0
    %vm1272 = vcmp.ne.s32.totalorder %v1208, 0
    %vm1273 = vcmp.ne.s32.totalorder %v1209, 0
    %vm1274 = vcmp.ne.s32.totalorder %v1210, 0
    %vm1275 = vcmp.ne.s32.totalorder %v1211, 0
    %vm1276 = vcmp.ne.s32.totalorder %v1212, 0
    %vm1277 = vcmp.ne.s32.totalorder %v1213, 0
    %vm1278 = vcmp.ne.s32.totalorder %v1214, 0
    %vm1279 = vcmp.ne.s32.totalorder %v1215, 0
    %vm1280 = vcmp.ne.s32.totalorder %v1216, 0
    %vm1281 = vcmp.ne.s32.totalorder %v1217, 0
    %vm1282 = vcmp.ne.s32.totalorder %v1218, 0
    %vm1283 = vcmp.ne.s32.totalorder %v1219, 0
    %vm1284 = vcmp.ne.s32.totalorder %v1220, 0
    %vm1285 = vcmp.ne.s32.totalorder %v1221, 0
    %vm1286 = vcmp.ne.s32.totalorder %v1222, 0
    %vm1287 = vcmp.ne.s32.totalorder %v1223, 0
    %vm1288 = vcmp.ne.s32.totalorder %v1224, 0
    %vm1289 = vcmp.ne.s32.totalorder %v1225, 0
    %vm1290 = vcmp.ne.s32.totalorder %v1226, 0
    %vm1291 = vcmp.ne.s32.totalorder %v1227, 0
    %vm1292 = vcmp.ne.s32.totalorder %v1228, 0
    %vm1293 = vcmp.ne.s32.totalorder %v1229, 0
    %vm1294 = vcmp.ne.s32.totalorder %v1230, 0
    %vm1295 = vcmp.ne.s32.totalorder %v1231, 0
    %vm1296 = vcmp.ne.s32.totalorder %v1232, 0
    %vm1297 = vcmp.ne.s32.totalorder %v1233, 0
    %vm1298 = vcmp.ne.s32.totalorder %v1234, 0
    %vm1299 = vcmp.ne.s32.totalorder %v1235, 0
    %vm1300 = vcmp.ne.s32.totalorder %v1236, 0
    %vm1301 = vcmp.ne.s32.totalorder %v1237, 0
    %vm1302 = vcmp.ne.s32.totalorder %v1238, 0
    %vm1303 = vcmp.ne.s32.totalorder %v1239, 0
    %vm1304 = vcmp.ne.s32.totalorder %v1240, 0
    %vm1305 = vcmp.ne.s32.totalorder %v1241, 0
    %vm1306 = vcmp.ne.s32.totalorder %v1242, 0
    %vm1307 = vcmp.ne.s32.totalorder %v1243, 0
    %vm1308 = vcmp.ne.s32.totalorder %v1244, 0
    %vm1309 = vcmp.ne.s32.totalorder %v1245, 0
    %vm1310 = vcmp.ne.s32.totalorder %v1246, 0
    %vm1311 = vcmp.ne.s32.totalorder %v1247, 0
    %vm1312 = vcmp.ne.s32.totalorder %v1248, 0
    %vm1313 = vcmp.ne.s32.totalorder %v1249, 0
    %vm1314 = vcmp.ne.s32.totalorder %v1250, 0
    %vm1315 = vcmp.ne.s32.totalorder %v1251, 0
    %vm1316 = vcmp.ne.s32.totalorder %v1252, 0
    %vm1317 = vcmp.ne.s32.totalorder %v1253, 0
    %vm1318 = vcmp.ne.s32.totalorder %v1254, 0
    %vm1319 = vcmp.ne.s32.totalorder %v1255, 0
    %v1320 = vsel %vm1256, 2.0, 0.0
    %v1321 = vsel %vm1257, 2.0, 0.0
    %v1322 = vsel %vm1258, 2.0, 0.0
    %v1323 = vsel %vm1259, 2.0, 0.0
    %v1324 = vsel %vm1260, 2.0, 0.0
    %v1325 = vsel %vm1261, 2.0, 0.0
    %v1326 = vsel %vm1262, 2.0, 0.0
    %v1327 = vsel %vm1263, 2.0, 0.0
    %v1328 = vsel %vm1264, 2.0, 0.0
    %v1329 = vsel %vm1265, 2.0, 0.0
    %v1330 = vsel %vm1266, 2.0, 0.0
    %v1331 = vsel %vm1267, 2.0, 0.0
    %v1332 = vsel %vm1268, 2.0, 0.0
    %v1333 = vsel %vm1269, 2.0, 0.0
    %v1334 = vsel %vm1270, 2.0, 0.0
    %v1335 = vsel %vm1271, 2.0, 0.0
    %v1336 = vsel %vm1272, 2.0, 0.0
    %v1337 = vsel %vm1273, 2.0, 0.0
    %v1338 = vsel %vm1274, 2.0, 0.0
    %v1339 = vsel %vm1275, 2.0, 0.0
    %v1340 = vsel %vm1276, 2.0, 0.0
    %v1341 = vsel %vm1277, 2.0, 0.0
    %v1342 = vsel %vm1278, 2.0, 0.0
    %v1343 = vsel %vm1279, 2.0, 0.0
    %v1344 = vsel %vm1280, 2.0, 0.0
    %v1345 = vsel %vm1281, 2.0, 0.0
    %v1346 = vsel %vm1282, 2.0, 0.0
    %v1347 = vsel %vm1283, 2.0, 0.0
    %v1348 = vsel %vm1284, 2.0, 0.0
    %v1349 = vsel %vm1285, 2.0, 0.0
    %v1350 = vsel %vm1286, 2.0, 0.0
    %v1351 = vsel %vm1287, 2.0, 0.0
    %v1352 = vsel %vm1288, 2.0, 0.0
    %v1353 = vsel %vm1289, 2.0, 0.0
    %v1354 = vsel %vm1290, 2.0, 0.0
    %v1355 = vsel %vm1291, 2.0, 0.0
    %v1356 = vsel %vm1292, 2.0, 0.0
    %v1357 = vsel %vm1293, 2.0, 0.0
    %v1358 = vsel %vm1294, 2.0, 0.0
    %v1359 = vsel %vm1295, 2.0, 0.0
    %v1360 = vsel %vm1296, 2.0, 0.0
    %v1361 = vsel %vm1297, 2.0, 0.0
    %v1362 = vsel %vm1298, 2.0, 0.0
    %v1363 = vsel %vm1299, 2.0, 0.0
    %v1364 = vsel %vm1300, 2.0, 0.0
    %v1365 = vsel %vm1301, 2.0, 0.0
    %v1366 = vsel %vm1302, 2.0, 0.0
    %v1367 = vsel %vm1303, 2.0, 0.0
    %v1368 = vsel %vm1304, 2.0, 0.0
    %v1369 = vsel %vm1305, 2.0, 0.0
    %v1370 = vsel %vm1306, 2.0, 0.0
    %v1371 = vsel %vm1307, 2.0, 0.0
    %v1372 = vsel %vm1308, 2.0, 0.0
    %v1373 = vsel %vm1309, 2.0, 0.0
    %v1374 = vsel %vm1310, 2.0, 0.0
    %v1375 = vsel %vm1311, 2.0, 0.0
    %v1376 = vsel %vm1312, 2.0, 0.0
    %v1377 = vsel %vm1313, 2.0, 0.0
    %v1378 = vsel %vm1314, 2.0, 0.0
    %v1379 = vsel %vm1315, 2.0, 0.0
    %v1380 = vsel %vm1316, 2.0, 0.0
    %v1381 = vsel %vm1317, 2.0, 0.0
    %v1382 = vsel %vm1318, 2.0, 0.0
    %v1383 = vsel %vm1319, 2.0, 0.0
    %v1384 = vmul.f32 %v416, %v1320
    %v1385 = vmul.f32 %v417, %v1321
    %v1386 = vmul.f32 %v418, %v1322
    %v1387 = vmul.f32 %v419, %v1323
    %v1388 = vmul.f32 %v420, %v1324
    %v1389 = vmul.f32 %v421, %v1325
    %v1390 = vmul.f32 %v422, %v1326
    %v1391 = vmul.f32 %v423, %v1327
    %v1392 = vmul.f32 %v424, %v1328
    %v1393 = vmul.f32 %v425, %v1329
    %v1394 = vmul.f32 %v426, %v1330
    %v1395 = vmul.f32 %v427, %v1331
    %v1396 = vmul.f32 %v428, %v1332
    %v1397 = vmul.f32 %v429, %v1333
    %v1398 = vmul.f32 %v430, %v1334
    %v1399 = vmul.f32 %v431, %v1335
    %v1400 = vmul.f32 %v432, %v1336
    %v1401 = vmul.f32 %v433, %v1337
    %v1402 = vmul.f32 %v434, %v1338
    %v1403 = vmul.f32 %v435, %v1339
    %v1404 = vmul.f32 %v436, %v1340
    %v1405 = vmul.f32 %v437, %v1341
    %v1406 = vmul.f32 %v438, %v1342
    %v1407 = vmul.f32 %v439, %v1343
    %v1408 = vmul.f32 %v440, %v1344
    %v1409 = vmul.f32 %v441, %v1345
    %v1410 = vmul.f32 %v442, %v1346
    %v1411 = vmul.f32 %v443, %v1347
    %v1412 = vmul.f32 %v444, %v1348
    %v1413 = vmul.f32 %v445, %v1349
    %v1414 = vmul.f32 %v446, %v1350
    %v1415 = vmul.f32 %v447, %v1351
    %v1416 = vmul.f32 %v448, %v1352
    %v1417 = vmul.f32 %v449, %v1353
    %v1418 = vmul.f32 %v450, %v1354
    %v1419 = vmul.f32 %v451, %v1355
    %v1420 = vmul.f32 %v452, %v1356
    %v1421 = vmul.f32 %v453, %v1357
    %v1422 = vmul.f32 %v454, %v1358
    %v1423 = vmul.f32 %v455, %v1359
    %v1424 = vmul.f32 %v456, %v1360
    %v1425 = vmul.f32 %v457, %v1361
    %v1426 = vmul.f32 %v458, %v1362
    %v1427 = vmul.f32 %v459, %v1363
    %v1428 = vmul.f32 %v460, %v1364
    %v1429 = vmul.f32 %v461, %v1365
    %v1430 = vmul.f32 %v462, %v1366
    %v1431 = vmul.f32 %v463, %v1367
    %v1432 = vmul.f32 %v464, %v1368
    %v1433 = vmul.f32 %v465, %v1369
    %v1434 = vmul.f32 %v466, %v1370
    %v1435 = vmul.f32 %v467, %v1371
    %v1436 = vmul.f32 %v468, %v1372
    %v1437 = vmul.f32 %v469, %v1373
    %v1438 = vmul.f32 %v470, %v1374
    %v1439 = vmul.f32 %v471, %v1375
    %v1440 = vmul.f32 %v472, %v1376
    %v1441 = vmul.f32 %v473, %v1377
    %v1442 = vmul.f32 %v474, %v1378
    %v1443 = vmul.f32 %v475, %v1379
    %v1444 = vmul.f32 %v476, %v1380
    %v1445 = vmul.f32 %v477, %v1381
    %v1446 = vmul.f32 %v478, %v1382
    %v1447 = vmul.f32 %v479, %v1383
    %v1448 = vpack.c.bf16 %v1386, %v1384
    %v1449 = vpack.c.bf16 %v1387, %v1385
    %v1450 = vpack.c.bf16 %v1390, %v1388
    %v1451 = vpack.c.bf16 %v1391, %v1389
    %v1452 = vpack.c.bf16 %v1394, %v1392
    %v1453 = vpack.c.bf16 %v1395, %v1393
    %v1454 = vpack.c.bf16 %v1398, %v1396
    %v1455 = vpack.c.bf16 %v1399, %v1397
    %v1456 = vpack.c.bf16 %v1402, %v1400
    %v1457 = vpack.c.bf16 %v1403, %v1401
    %v1458 = vpack.c.bf16 %v1406, %v1404
    %v1459 = vpack.c.bf16 %v1407, %v1405
    %v1460 = vpack.c.bf16 %v1410, %v1408
    %v1461 = vpack.c.bf16 %v1411, %v1409
    %v1462 = vpack.c.bf16 %v1414, %v1412
    %v1463 = vpack.c.bf16 %v1415, %v1413
    %v1464 = vpack.c.bf16 %v1418, %v1416
    %v1465 = vpack.c.bf16 %v1419, %v1417
    %v1466 = vpack.c.bf16 %v1422, %v1420
    %v1467 = vpack.c.bf16 %v1423, %v1421
    %v1468 = vpack.c.bf16 %v1426, %v1424
    %v1469 = vpack.c.bf16 %v1427, %v1425
    %v1470 = vpack.c.bf16 %v1430, %v1428
    %v1471 = vpack.c.bf16 %v1431, %v1429
    %v1472 = vpack.c.bf16 %v1434, %v1432
    %v1473 = vpack.c.bf16 %v1435, %v1433
    %v1474 = vpack.c.bf16 %v1438, %v1436
    %v1475 = vpack.c.bf16 %v1439, %v1437
    %v1476 = vpack.c.bf16 %v1442, %v1440
    %v1477 = vpack.c.bf16 %v1443, %v1441
    %v1478 = vpack.c.bf16 %v1446, %v1444
    %v1479 = vpack.c.bf16 %v1447, %v1445
    %v1480 = vld [vmem:[%s4] sm:$0xf]
    %v1481 = vld [vmem:[%s4 + $0x4] sm:$0xf]
    %v1482 = vld [vmem:[%s4 + $0x8] sm:$0xf]
    %v1483 = vld [vmem:[%s4 + $0xc] sm:$0xf]
    %v1484 = vld [vmem:[%s4 + $0x10] sm:$0xf]
    %v1485 = vld [vmem:[%s4 + $0x14] sm:$0xf]
    %v1486 = vld [vmem:[%s4 + $0x18] sm:$0xf]
    %v1487 = vld [vmem:[%s4 + $0x1c] sm:$0xf]
    %v1488 = vld [vmem:[%s4 + $0x20] sm:$0xf]
    %v1489 = vld [vmem:[%s4 + $0x24] sm:$0xf]
    %v1490 = vld [vmem:[%s4 + $0x28] sm:$0xf]
    %v1491 = vld [vmem:[%s4 + $0x2c] sm:$0xf]
    %v1492 = vld [vmem:[%s4 + $0x30] sm:$0xf]
    %v1493 = vld [vmem:[%s4 + $0x34] sm:$0xf]
    %v1494 = vld [vmem:[%s4 + $0x38] sm:$0xf]
    %v1495 = vld [vmem:[%s4 + $0x3c] sm:$0xf]
    %v1496 = vld [vmem:[%s4 + $0x40] sm:$0xf]
    %v1497 = vld [vmem:[%s4 + $0x44] sm:$0xf]
    %v1498 = vld [vmem:[%s4 + $0x48] sm:$0xf]
    %v1499 = vld [vmem:[%s4 + $0x4c] sm:$0xf]
    %v1500 = vld [vmem:[%s4 + $0x50] sm:$0xf]
    %v1501 = vld [vmem:[%s4 + $0x54] sm:$0xf]
    %v1502 = vld [vmem:[%s4 + $0x58] sm:$0xf]
    %v1503 = vld [vmem:[%s4 + $0x5c] sm:$0xf]
    %v1504 = vld [vmem:[%s4 + $0x60] sm:$0xf]
    %v1505 = vld [vmem:[%s4 + $0x64] sm:$0xf]
    %v1506 = vld [vmem:[%s4 + $0x68] sm:$0xf]
    %v1507 = vld [vmem:[%s4 + $0x6c] sm:$0xf]
    %v1508 = vld [vmem:[%s4 + $0x70] sm:$0xf]
    %v1509 = vld [vmem:[%s4 + $0x74] sm:$0xf]
    %v1510 = vld [vmem:[%s4 + $0x78] sm:$0xf]
    %v1511 = vld [vmem:[%s4 + $0x7c] sm:$0xf]
    %v1512 = vld [vmem:[%s5] sm:$0x1]
    %v1514 = vlaneseq
    %v1515 = vshrl.u32 %v1514, 7
    %v1516 = vsub.s32 0, %v1515
    %v1517 = vrot.slane %v1512, %v1516
    %v1551 = vunpack.c.l.b16 %v1480
    %v1552 = vunpack.c.l.b16 %v1481
    %v1553 = vunpack.c.l.b16 %v1482
    %v1554 = vunpack.c.l.b16 %v1483
    %v1555 = vunpack.c.l.b16 %v1484
    %v1556 = vunpack.c.l.b16 %v1485
    %v1557 = vunpack.c.l.b16 %v1486
    %v1558 = vunpack.c.l.b16 %v1487
    %v1559 = vunpack.c.l.b16 %v1488
    %v1560 = vunpack.c.l.b16 %v1489
    %v1561 = vunpack.c.l.b16 %v1490
    %v1562 = vunpack.c.l.b16 %v1491
    %v1563 = vunpack.c.l.b16 %v1492
    %v1564 = vunpack.c.l.b16 %v1493
    %v1565 = vunpack.c.l.b16 %v1494
    %v1566 = vunpack.c.l.b16 %v1495
    %v1567 = vunpack.c.l.b16 %v1496
    %v1568 = vunpack.c.l.b16 %v1497
    %v1569 = vunpack.c.l.b16 %v1498
    %v1570 = vunpack.c.l.b16 %v1499
    %v1571 = vunpack.c.l.b16 %v1500
    %v1572 = vunpack.c.l.b16 %v1501
    %v1573 = vunpack.c.l.b16 %v1502
    %v1574 = vunpack.c.l.b16 %v1503
    %v1575 = vunpack.c.l.b16 %v1504
    %v1576 = vunpack.c.l.b16 %v1505
    %v1577 = vunpack.c.l.b16 %v1506
    %v1578 = vunpack.c.l.b16 %v1507
    %v1579 = vunpack.c.l.b16 %v1508
    %v1580 = vunpack.c.l.b16 %v1509
    %v1581 = vunpack.c.l.b16 %v1510
    %v1582 = vunpack.c.l.b16 %v1511
    %v1583 = vpack.c.b16 %v1552, %v1551
    %v1584 = vpack.c.b16 %v1554, %v1553
    %v1585 = vpack.c.b16 %v1556, %v1555
    %v1586 = vpack.c.b16 %v1558, %v1557
    %v1587 = vpack.c.b16 %v1560, %v1559
    %v1588 = vpack.c.b16 %v1562, %v1561
    %v1589 = vpack.c.b16 %v1564, %v1563
    %v1590 = vpack.c.b16 %v1566, %v1565
    %v1591 = vpack.c.b16 %v1568, %v1567
    %v1592 = vpack.c.b16 %v1570, %v1569
    %v1593 = vpack.c.b16 %v1572, %v1571
    %v1594 = vpack.c.b16 %v1574, %v1573
    %v1595 = vpack.c.b16 %v1576, %v1575
    %v1596 = vpack.c.b16 %v1578, %v1577
    %v1597 = vpack.c.b16 %v1580, %v1579
    %v1598 = vpack.c.b16 %v1582, %v1581
    %1615 = vmatprep.subr.bf16.mxu0 0
    %1616 = vmatpush1.bf16.msra.mxu0 %v1583
    %1617 = vmatprep.subr.bf16.mxu0 0
    %1618 = vmatpush1.bf16.msra.mxu0 %v1584
    %1619 = vmatprep.subr.bf16.mxu0 0
    %1620 = vmatpush1.bf16.msra.mxu0 %v1585
    %1621 = vmatprep.subr.bf16.mxu0 0
    %1622 = vmatpush1.bf16.msra.mxu0 %v1586
    %1623 = vmatprep.subr.bf16.mxu0 0
    %1624 = vmatpush1.bf16.msra.mxu0 %v1587
    %1625 = vmatprep.subr.bf16.mxu0 0
    %1626 = vmatpush1.bf16.msra.mxu0 %v1588
    %1627 = vmatprep.subr.bf16.mxu0 0
    %1628 = vmatpush1.bf16.msra.mxu0 %v1589
    %1629 = vmatprep.subr.bf16.mxu0 0
    %1630 = vmatpush1.bf16.msra.mxu0 %v1590
    %1631 = vmatprep.subr.bf16.mxu0 0
    %1632 = vmatpush1.bf16.msra.mxu0 %v1591
    %1633 = vmatprep.subr.bf16.mxu0 0
    %1634 = vmatpush1.bf16.msra.mxu0 %v1592
    %1635 = vmatprep.subr.bf16.mxu0 0
    %1636 = vmatpush1.bf16.msra.mxu0 %v1593
    %1637 = vmatprep.subr.bf16.mxu0 0
    %1638 = vmatpush1.bf16.msra.mxu0 %v1594
    %1639 = vmatprep.subr.bf16.mxu0 0
    %1640 = vmatpush1.bf16.msra.mxu0 %v1595
    %1641 = vmatprep.subr.bf16.mxu0 0
    %1642 = vmatpush1.bf16.msra.mxu0 %v1596
    %1643 = vmatprep.subr.bf16.mxu0 0
    %1644 = vmatpush1.bf16.msra.mxu0 %v1597
    %1645 = vmatprep.subr.bf16.mxu0 0
    %1646 = vmatpush1.bf16.msra.mxu0 %v1598
    %1647 = vmatprep.mubr.bf16.mxu0 %v1449
    %1648 = vmatmul.mubr.bf16.gmra.mrb[0].mxu0 %v1448
    %v1649 = vpop.f32.mrb[0].mxu0
    %v1650 = vadd.f32 %v1517, %v1649
    %v1651 = vpop.f32.mrb[0].mxu0
    %v1652 = vpop.f32.mrb[0].mxu0
    %v1653 = vadd.f32 %v1517, %v1652
    %v1654 = vpop.f32.mrb[0].mxu0
    %1655 = vmatprep.mubr.bf16.mxu0 %v1451
    %1656 = vmatmul.mubr.bf16.gmra.mrb[0].mxu0 %v1450
    %v1657 = vpop.f32.mrb[0].mxu0
    %v1658 = vadd.f32 %v1517, %v1657
    %v1659 = vpop.f32.mrb[0].mxu0
    %v1660 = vpop.f32.mrb[0].mxu0
    %v1661 = vadd.f32 %v1517, %v1660
    %v1662 = vpop.f32.mrb[0].mxu0
    %1663 = vmatprep.mubr.bf16.mxu0 %v1453
    %1664 = vmatmul.mubr.bf16.gmra.mrb[0].mxu0 %v1452
    %v1665 = vpop.f32.mrb[0].mxu0
    %v1666 = vadd.f32 %v1517, %v1665
    %v1667 = vpop.f32.mrb[0].mxu0
    %v1668 = vpop.f32.mrb[0].mxu0
    %v1669 = vadd.f32 %v1517, %v1668
    %v1670 = vpop.f32.mrb[0].mxu0
    %1671 = vmatprep.mubr.bf16.mxu0 %v1455
    %1672 = vmatmul.mubr.bf16.gmra.mrb[0].mxu0 %v1454
    %v1673 = vpop.f32.mrb[0].mxu0
    %v1674 = vadd.f32 %v1517, %v1673
    %v1675 = vpop.f32.mrb[0].mxu0
    %v1676 = vpop.f32.mrb[0].mxu0
    %v1677 = vadd.f32 %v1517, %v1676
    %v1678 = vpop.f32.mrb[0].mxu0
    %1679 = vmatprep.mubr.bf16.mxu0 %v1457
    %1680 = vmatmul.mubr.bf16.gmra.mrb[0].mxu0 %v1456
    %v1681 = vpop.f32.mrb[0].mxu0
    %v1682 = vadd.f32 %v1517, %v1681
    %v1683 = vpop.f32.mrb[0].mxu0
    %v1684 = vpop.f32.mrb[0].mxu0
    %v1685 = vadd.f32 %v1517, %v1684
    %v1686 = vpop.f32.mrb[0].mxu0
    %1687 = vmatprep.mubr.bf16.mxu0 %v1459
    %1688 = vmatmul.mubr.bf16.gmra.mrb[0].mxu0 %v1458
    %v1689 = vpop.f32.mrb[0].mxu0
    %v1690 = vadd.f32 %v1517, %v1689
    %v1691 = vpop.f32.mrb[0].mxu0
    %v1692 = vpop.f32.mrb[0].mxu0
    %v1693 = vadd.f32 %v1517, %v1692
    %v1694 = vpop.f32.mrb[0].mxu0
    %1695 = vmatprep.mubr.bf16.mxu0 %v1461
    %1696 = vmatmul.mubr.bf16.gmra.mrb[0].mxu0 %v1460
    %v1697 = vpop.f32.mrb[0].mxu0
    %v1698 = vadd.f32 %v1517, %v1697
    %v1699 = vpop.f32.mrb[0].mxu0
    %v1700 = vpop.f32.mrb[0].mxu0
    %v1701 = vadd.f32 %v1517, %v1700
    %v1702 = vpop.f32.mrb[0].mxu0
    %1703 = vmatprep.mubr.bf16.mxu0 %v1463
    %1704 = vmatmul.mubr.bf16.gmra.mrb[0].mxu0 %v1462
    %v1705 = vpop.f32.mrb[0].mxu0
    %v1706 = vadd.f32 %v1517, %v1705
    %v1707 = vpop.f32.mrb[0].mxu0
    %v1708 = vpop.f32.mrb[0].mxu0
    %v1709 = vadd.f32 %v1517, %v1708
    %v1710 = vpop.f32.mrb[0].mxu0
    %1711 = vmatprep.mubr.bf16.mxu0 %v1465
    %1712 = vmatmul.mubr.bf16.gmra.mrb[0].mxu0 %v1464
    %v1713 = vpop.f32.mrb[0].mxu0
    %v1714 = vadd.f32 %v1517, %v1713
    %v1715 = vpop.f32.mrb[0].mxu0
    %v1716 = vpop.f32.mrb[0].mxu0
    %v1717 = vadd.f32 %v1517, %v1716
    %v1718 = vpop.f32.mrb[0].mxu0
    %1719 = vmatprep.mubr.bf16.mxu0 %v1467
    %1720 = vmatmul.mubr.bf16.gmra.mrb[0].mxu0 %v1466
    %v1721 = vpop.f32.mrb[0].mxu0
    %v1722 = vadd.f32 %v1517, %v1721
    %v1723 = vpop.f32.mrb[0].mxu0
    %v1724 = vpop.f32.mrb[0].mxu0
    %v1725 = vadd.f32 %v1517, %v1724
    %v1726 = vpop.f32.mrb[0].mxu0
    %1727 = vmatprep.mubr.bf16.mxu0 %v1469
    %1728 = vmatmul.mubr.bf16.gmra.mrb[0].mxu0 %v1468
    %v1729 = vpop.f32.mrb[0].mxu0
    %v1730 = vadd.f32 %v1517, %v1729
    %v1731 = vpop.f32.mrb[0].mxu0
    %v1732 = vpop.f32.mrb[0].mxu0
    %v1733 = vadd.f32 %v1517, %v1732
    %v1734 = vpop.f32.mrb[0].mxu0
    %1735 = vmatprep.mubr.bf16.mxu0 %v1471
    %1736 = vmatmul.mubr.bf16.gmra.mrb[0].mxu0 %v1470
    %v1737 = vpop.f32.mrb[0].mxu0
    %v1738 = vadd.f32 %v1517, %v1737
    %v1739 = vpop.f32.mrb[0].mxu0
    %v1740 = vpop.f32.mrb[0].mxu0
    %v1741 = vadd.f32 %v1517, %v1740
    %v1742 = vpop.f32.mrb[0].mxu0
    %1743 = vmatprep.mubr.bf16.mxu0 %v1473
    %1744 = vmatmul.mubr.bf16.gmra.mrb[0].mxu0 %v1472
    %v1745 = vpop.f32.mrb[0].mxu0
    %v1746 = vadd.f32 %v1517, %v1745
    %v1747 = vpop.f32.mrb[0].mxu0
    %v1748 = vpop.f32.mrb[0].mxu0
    %v1749 = vadd.f32 %v1517, %v1748
    %v1750 = vpop.f32.mrb[0].mxu0
    %1751 = vmatprep.mubr.bf16.mxu0 %v1475
    %1752 = vmatmul.mubr.bf16.gmra.mrb[0].mxu0 %v1474
    %v1753 = vpop.f32.mrb[0].mxu0
    %v1754 = vadd.f32 %v1517, %v1753
    %v1755 = vpop.f32.mrb[0].mxu0
    %v1756 = vpop.f32.mrb[0].mxu0
    %v1757 = vadd.f32 %v1517, %v1756
    %v1758 = vpop.f32.mrb[0].mxu0
    %1759 = vmatprep.mubr.bf16.mxu0 %v1477
    %1760 = vmatmul.mubr.bf16.gmra.mrb[0].mxu0 %v1476
    %v1761 = vpop.f32.mrb[0].mxu0
    %v1762 = vadd.f32 %v1517, %v1761
    %v1763 = vpop.f32.mrb[0].mxu0
    %v1764 = vpop.f32.mrb[0].mxu0
    %v1765 = vadd.f32 %v1517, %v1764
    %v1766 = vpop.f32.mrb[0].mxu0
    %1767 = vmatprep.mubr.bf16.mxu0 %v1479
    %1768 = vmatmul.mubr.bf16.gmra.mrb[0].mxu0 %v1478
    %v1769 = vpop.f32.mrb[0].mxu0
    %v1770 = vadd.f32 %v1517, %v1769
    %v1771 = vpop.f32.mrb[0].mxu0
    %v1772 = vpop.f32.mrb[0].mxu0
    %v1773 = vadd.f32 %v1517, %v1772
    %v1774 = vpop.f32.mrb[0].mxu0
    %1775 = vdwg.mxu0
    %v1776 = vmax.f32 %v1650, 0.0
    %v1777 = vmax.f32 %v1653, 0.0
    %v1778 = vmax.f32 %v1658, 0.0
    %v1779 = vmax.f32 %v1661, 0.0
    %v1780 = vmax.f32 %v1666, 0.0
    %v1781 = vmax.f32 %v1669, 0.0
    %v1782 = vmax.f32 %v1674, 0.0
    %v1783 = vmax.f32 %v1677, 0.0
    %v1784 = vmax.f32 %v1682, 0.0
    %v1785 = vmax.f32 %v1685, 0.0
    %v1786 = vmax.f32 %v1690, 0.0
    %v1787 = vmax.f32 %v1693, 0.0
    %v1788 = vmax.f32 %v1698, 0.0
    %v1789 = vmax.f32 %v1701, 0.0
    %v1790 = vmax.f32 %v1706, 0.0
    %v1791 = vmax.f32 %v1709, 0.0
    %v1792 = vmax.f32 %v1714, 0.0
    %v1793 = vmax.f32 %v1717, 0.0
    %v1794 = vmax.f32 %v1722, 0.0
    %v1795 = vmax.f32 %v1725, 0.0
    %v1796 = vmax.f32 %v1730, 0.0
    %v1797 = vmax.f32 %v1733, 0.0
    %v1798 = vmax.f32 %v1738, 0.0
    %v1799 = vmax.f32 %v1741, 0.0
    %v1800 = vmax.f32 %v1746, 0.0
    %v1801 = vmax.f32 %v1749, 0.0
    %v1802 = vmax.f32 %v1754, 0.0
    %v1803 = vmax.f32 %v1757, 0.0
    %v1804 = vmax.f32 %v1762, 0.0
    %v1805 = vmax.f32 %v1765, 0.0
    %v1806 = vmax.f32 %v1770, 0.0
    %v1807 = vmax.f32 %v1773, 0.0
    %v1808 = vadd.s32 %v514, 256
    %v1809 = vmul.u32 %v1808, 2246822507
    %v1810 = vadd.s32 %v582, %v1809
    %v1811 = vadd.s32 %v583, %v1809
    %v1812 = vadd.s32 %v584, %v1809
    %v1813 = vadd.s32 %v585, %v1809
    %v1814 = vadd.s32 %v586, %v1809
    %v1815 = vadd.s32 %v587, %v1809
    %v1816 = vadd.s32 %v588, %v1809
    %v1817 = vadd.s32 %v589, %v1809
    %v1818 = vadd.s32 %v590, %v1809
    %v1819 = vadd.s32 %v591, %v1809
    %v1820 = vadd.s32 %v592, %v1809
    %v1821 = vadd.s32 %v593, %v1809
    %v1822 = vadd.s32 %v594, %v1809
    %v1823 = vadd.s32 %v595, %v1809
    %v1824 = vadd.s32 %v596, %v1809
    %v1825 = vadd.s32 %v597, %v1809
    %v1826 = vadd.s32 %v598, %v1809
    %v1827 = vadd.s32 %v599, %v1809
    %v1828 = vadd.s32 %v600, %v1809
    %v1829 = vadd.s32 %v601, %v1809
    %v1830 = vadd.s32 %v602, %v1809
    %v1831 = vadd.s32 %v603, %v1809
    %v1832 = vadd.s32 %v604, %v1809
    %v1833 = vadd.s32 %v605, %v1809
    %v1834 = vadd.s32 %v606, %v1809
    %v1835 = vadd.s32 %v607, %v1809
    %v1836 = vadd.s32 %v608, %v1809
    %v1837 = vadd.s32 %v609, %v1809
    %v1838 = vadd.s32 %v610, %v1809
    %v1839 = vadd.s32 %v611, %v1809
    %v1840 = vadd.s32 %v612, %v1809
    %v1841 = vadd.s32 %v613, %v1809
    %v1842 = vshrl.u32 %v1810, 16
    %v1843 = vshrl.u32 %v1811, 16
    %v1844 = vshrl.u32 %v1812, 16
    %v1845 = vshrl.u32 %v1813, 16
    %v1846 = vshrl.u32 %v1814, 16
    %v1847 = vshrl.u32 %v1815, 16
    %v1848 = vshrl.u32 %v1816, 16
    %v1849 = vshrl.u32 %v1817, 16
    %v1850 = vshrl.u32 %v1818, 16
    %v1851 = vshrl.u32 %v1819, 16
    %v1852 = vshrl.u32 %v1820, 16
    %v1853 = vshrl.u32 %v1821, 16
    %v1854 = vshrl.u32 %v1822, 16
    %v1855 = vshrl.u32 %v1823, 16
    %v1856 = vshrl.u32 %v1824, 16
    %v1857 = vshrl.u32 %v1825, 16
    %v1858 = vshrl.u32 %v1826, 16
    %v1859 = vshrl.u32 %v1827, 16
    %v1860 = vshrl.u32 %v1828, 16
    %v1861 = vshrl.u32 %v1829, 16
    %v1862 = vshrl.u32 %v1830, 16
    %v1863 = vshrl.u32 %v1831, 16
    %v1864 = vshrl.u32 %v1832, 16
    %v1865 = vshrl.u32 %v1833, 16
    %v1866 = vshrl.u32 %v1834, 16
    %v1867 = vshrl.u32 %v1835, 16
    %v1868 = vshrl.u32 %v1836, 16
    %v1869 = vshrl.u32 %v1837, 16
    %v1870 = vshrl.u32 %v1838, 16
    %v1871 = vshrl.u32 %v1839, 16
    %v1872 = vshrl.u32 %v1840, 16
    %v1873 = vshrl.u32 %v1841, 16
    %v1874 = vxor.u32 %v1810, %v1842
    %v1875 = vxor.u32 %v1811, %v1843
    %v1876 = vxor.u32 %v1812, %v1844
    %v1877 = vxor.u32 %v1813, %v1845
    %v1878 = vxor.u32 %v1814, %v1846
    %v1879 = vxor.u32 %v1815, %v1847
    %v1880 = vxor.u32 %v1816, %v1848
    %v1881 = vxor.u32 %v1817, %v1849
    %v1882 = vxor.u32 %v1818, %v1850
    %v1883 = vxor.u32 %v1819, %v1851
    %v1884 = vxor.u32 %v1820, %v1852
    %v1885 = vxor.u32 %v1821, %v1853
    %v1886 = vxor.u32 %v1822, %v1854
    %v1887 = vxor.u32 %v1823, %v1855
    %v1888 = vxor.u32 %v1824, %v1856
    %v1889 = vxor.u32 %v1825, %v1857
    %v1890 = vxor.u32 %v1826, %v1858
    %v1891 = vxor.u32 %v1827, %v1859
    %v1892 = vxor.u32 %v1828, %v1860
    %v1893 = vxor.u32 %v1829, %v1861
    %v1894 = vxor.u32 %v1830, %v1862
    %v1895 = vxor.u32 %v1831, %v1863
    %v1896 = vxor.u32 %v1832, %v1864
    %v1897 = vxor.u32 %v1833, %v1865
    %v1898 = vxor.u32 %v1834, %v1866
    %v1899 = vxor.u32 %v1835, %v1867
    %v1900 = vxor.u32 %v1836, %v1868
    %v1901 = vxor.u32 %v1837, %v1869
    %v1902 = vxor.u32 %v1838, %v1870
    %v1903 = vxor.u32 %v1839, %v1871
    %v1904 = vxor.u32 %v1840, %v1872
    %v1905 = vxor.u32 %v1841, %v1873
    %v1906 = vmul.u32 %v1874, 2146121005
    %v1907 = vmul.u32 %v1875, 2146121005
    %v1908 = vmul.u32 %v1876, 2146121005
    %v1909 = vmul.u32 %v1877, 2146121005
    %v1910 = vmul.u32 %v1878, 2146121005
    %v1911 = vmul.u32 %v1879, 2146121005
    %v1912 = vmul.u32 %v1880, 2146121005
    %v1913 = vmul.u32 %v1881, 2146121005
    %v1914 = vmul.u32 %v1882, 2146121005
    %v1915 = vmul.u32 %v1883, 2146121005
    %v1916 = vmul.u32 %v1884, 2146121005
    %v1917 = vmul.u32 %v1885, 2146121005
    %v1918 = vmul.u32 %v1886, 2146121005
    %v1919 = vmul.u32 %v1887, 2146121005
    %v1920 = vmul.u32 %v1888, 2146121005
    %v1921 = vmul.u32 %v1889, 2146121005
    %v1922 = vmul.u32 %v1890, 2146121005
    %v1923 = vmul.u32 %v1891, 2146121005
    %v1924 = vmul.u32 %v1892, 2146121005
    %v1925 = vmul.u32 %v1893, 2146121005
    %v1926 = vmul.u32 %v1894, 2146121005
    %v1927 = vmul.u32 %v1895, 2146121005
    %v1928 = vmul.u32 %v1896, 2146121005
    %v1929 = vmul.u32 %v1897, 2146121005
    %v1930 = vmul.u32 %v1898, 2146121005
    %v1931 = vmul.u32 %v1899, 2146121005
    %v1932 = vmul.u32 %v1900, 2146121005
    %v1933 = vmul.u32 %v1901, 2146121005
    %v1934 = vmul.u32 %v1902, 2146121005
    %v1935 = vmul.u32 %v1903, 2146121005
    %v1936 = vmul.u32 %v1904, 2146121005
    %v1937 = vmul.u32 %v1905, 2146121005
    %v1938 = vshrl.u32 %v1906, 15
    %v1939 = vshrl.u32 %v1907, 15
    %v1940 = vshrl.u32 %v1908, 15
    %v1941 = vshrl.u32 %v1909, 15
    %v1942 = vshrl.u32 %v1910, 15
    %v1943 = vshrl.u32 %v1911, 15
    %v1944 = vshrl.u32 %v1912, 15
    %v1945 = vshrl.u32 %v1913, 15
    %v1946 = vshrl.u32 %v1914, 15
    %v1947 = vshrl.u32 %v1915, 15
    %v1948 = vshrl.u32 %v1916, 15
    %v1949 = vshrl.u32 %v1917, 15
    %v1950 = vshrl.u32 %v1918, 15
    %v1951 = vshrl.u32 %v1919, 15
    %v1952 = vshrl.u32 %v1920, 15
    %v1953 = vshrl.u32 %v1921, 15
    %v1954 = vshrl.u32 %v1922, 15
    %v1955 = vshrl.u32 %v1923, 15
    %v1956 = vshrl.u32 %v1924, 15
    %v1957 = vshrl.u32 %v1925, 15
    %v1958 = vshrl.u32 %v1926, 15
    %v1959 = vshrl.u32 %v1927, 15
    %v1960 = vshrl.u32 %v1928, 15
    %v1961 = vshrl.u32 %v1929, 15
    %v1962 = vshrl.u32 %v1930, 15
    %v1963 = vshrl.u32 %v1931, 15
    %v1964 = vshrl.u32 %v1932, 15
    %v1965 = vshrl.u32 %v1933, 15
    %v1966 = vshrl.u32 %v1934, 15
    %v1967 = vshrl.u32 %v1935, 15
    %v1968 = vshrl.u32 %v1936, 15
    %v1969 = vshrl.u32 %v1937, 15
    %v1970 = vxor.u32 %v1906, %v1938
    %v1971 = vxor.u32 %v1907, %v1939
    %v1972 = vxor.u32 %v1908, %v1940
    %v1973 = vxor.u32 %v1909, %v1941
    %v1974 = vxor.u32 %v1910, %v1942
    %v1975 = vxor.u32 %v1911, %v1943
    %v1976 = vxor.u32 %v1912, %v1944
    %v1977 = vxor.u32 %v1913, %v1945
    %v1978 = vxor.u32 %v1914, %v1946
    %v1979 = vxor.u32 %v1915, %v1947
    %v1980 = vxor.u32 %v1916, %v1948
    %v1981 = vxor.u32 %v1917, %v1949
    %v1982 = vxor.u32 %v1918, %v1950
    %v1983 = vxor.u32 %v1919, %v1951
    %v1984 = vxor.u32 %v1920, %v1952
    %v1985 = vxor.u32 %v1921, %v1953
    %v1986 = vxor.u32 %v1922, %v1954
    %v1987 = vxor.u32 %v1923, %v1955
    %v1988 = vxor.u32 %v1924, %v1956
    %v1989 = vxor.u32 %v1925, %v1957
    %v1990 = vxor.u32 %v1926, %v1958
    %v1991 = vxor.u32 %v1927, %v1959
    %v1992 = vxor.u32 %v1928, %v1960
    %v1993 = vxor.u32 %v1929, %v1961
    %v1994 = vxor.u32 %v1930, %v1962
    %v1995 = vxor.u32 %v1931, %v1963
    %v1996 = vxor.u32 %v1932, %v1964
    %v1997 = vxor.u32 %v1933, %v1965
    %v1998 = vxor.u32 %v1934, %v1966
    %v1999 = vxor.u32 %v1935, %v1967
    %v2000 = vxor.u32 %v1936, %v1968
    %v2001 = vxor.u32 %v1937, %v1969
    %v2002 = vmul.u32 %v1970, 2221713035
    %v2003 = vmul.u32 %v1971, 2221713035
    %v2004 = vmul.u32 %v1972, 2221713035
    %v2005 = vmul.u32 %v1973, 2221713035
    %v2006 = vmul.u32 %v1974, 2221713035
    %v2007 = vmul.u32 %v1975, 2221713035
    %v2008 = vmul.u32 %v1976, 2221713035
    %v2009 = vmul.u32 %v1977, 2221713035
    %v2010 = vmul.u32 %v1978, 2221713035
    %v2011 = vmul.u32 %v1979, 2221713035
    %v2012 = vmul.u32 %v1980, 2221713035
    %v2013 = vmul.u32 %v1981, 2221713035
    %v2014 = vmul.u32 %v1982, 2221713035
    %v2015 = vmul.u32 %v1983, 2221713035
    %v2016 = vmul.u32 %v1984, 2221713035
    %v2017 = vmul.u32 %v1985, 2221713035
    %v2018 = vmul.u32 %v1986, 2221713035
    %v2019 = vmul.u32 %v1987, 2221713035
    %v2020 = vmul.u32 %v1988, 2221713035
    %v2021 = vmul.u32 %v1989, 2221713035
    %v2022 = vmul.u32 %v1990, 2221713035
    %v2023 = vmul.u32 %v1991, 2221713035
    %v2024 = vmul.u32 %v1992, 2221713035
    %v2025 = vmul.u32 %v1993, 2221713035
    %v2026 = vmul.u32 %v1994, 2221713035
    %v2027 = vmul.u32 %v1995, 2221713035
    %v2028 = vmul.u32 %v1996, 2221713035
    %v2029 = vmul.u32 %v1997, 2221713035
    %v2030 = vmul.u32 %v1998, 2221713035
    %v2031 = vmul.u32 %v1999, 2221713035
    %v2032 = vmul.u32 %v2000, 2221713035
    %v2033 = vmul.u32 %v2001, 2221713035
    %v2034 = vshrl.u32 %v2002, 16
    %v2035 = vshrl.u32 %v2003, 16
    %v2036 = vshrl.u32 %v2004, 16
    %v2037 = vshrl.u32 %v2005, 16
    %v2038 = vshrl.u32 %v2006, 16
    %v2039 = vshrl.u32 %v2007, 16
    %v2040 = vshrl.u32 %v2008, 16
    %v2041 = vshrl.u32 %v2009, 16
    %v2042 = vshrl.u32 %v2010, 16
    %v2043 = vshrl.u32 %v2011, 16
    %v2044 = vshrl.u32 %v2012, 16
    %v2045 = vshrl.u32 %v2013, 16
    %v2046 = vshrl.u32 %v2014, 16
    %v2047 = vshrl.u32 %v2015, 16
    %v2048 = vshrl.u32 %v2016, 16
    %v2049 = vshrl.u32 %v2017, 16
    %v2050 = vshrl.u32 %v2018, 16
    %v2051 = vshrl.u32 %v2019, 16
    %v2052 = vshrl.u32 %v2020, 16
    %v2053 = vshrl.u32 %v2021, 16
    %v2054 = vshrl.u32 %v2022, 16
    %v2055 = vshrl.u32 %v2023, 16
    %v2056 = vshrl.u32 %v2024, 16
    %v2057 = vshrl.u32 %v2025, 16
    %v2058 = vshrl.u32 %v2026, 16
    %v2059 = vshrl.u32 %v2027, 16
    %v2060 = vshrl.u32 %v2028, 16
    %v2061 = vshrl.u32 %v2029, 16
    %v2062 = vshrl.u32 %v2030, 16
    %v2063 = vshrl.u32 %v2031, 16
    %v2064 = vshrl.u32 %v2032, 16
    %v2065 = vshrl.u32 %v2033, 16
    %v2066 = vxor.u32 %v2002, %v2034
    %v2067 = vxor.u32 %v2003, %v2035
    %v2068 = vxor.u32 %v2004, %v2036
    %v2069 = vxor.u32 %v2005, %v2037
    %v2070 = vxor.u32 %v2006, %v2038
    %v2071 = vxor.u32 %v2007, %v2039
    %v2072 = vxor.u32 %v2008, %v2040
    %v2073 = vxor.u32 %v2009, %v2041
    %v2074 = vxor.u32 %v2010, %v2042
    %v2075 = vxor.u32 %v2011, %v2043
    %v2076 = vxor.u32 %v2012, %v2044
    %v2077 = vxor.u32 %v2013, %v2045
    %v2078 = vxor.u32 %v2014, %v2046
    %v2079 = vxor.u32 %v2015, %v2047
    %v2080 = vxor.u32 %v2016, %v2048
    %v2081 = vxor.u32 %v2017, %v2049
    %v2082 = vxor.u32 %v2018, %v2050
    %v2083 = vxor.u32 %v2019, %v2051
    %v2084 = vxor.u32 %v2020, %v2052
    %v2085 = vxor.u32 %v2021, %v2053
    %v2086 = vxor.u32 %v2022, %v2054
    %v2087 = vxor.u32 %v2023, %v2055
    %v2088 = vxor.u32 %v2024, %v2056
    %v2089 = vxor.u32 %v2025, %v2057
    %v2090 = vxor.u32 %v2026, %v2058
    %v2091 = vxor.u32 %v2027, %v2059
    %v2092 = vxor.u32 %v2028, %v2060
    %v2093 = vxor.u32 %v2029, %v2061
    %v2094 = vxor.u32 %v2030, %v2062
    %v2095 = vxor.u32 %v2031, %v2063
    %v2096 = vxor.u32 %v2032, %v2064
    %v2097 = vxor.u32 %v2033, %v2065
    %v2098 = vand.u32 %v2066, 2147483648
    %v2099 = vand.u32 %v2067, 2147483648
    %v2100 = vand.u32 %v2068, 2147483648
    %v2101 = vand.u32 %v2069, 2147483648
    %v2102 = vand.u32 %v2070, 2147483648
    %v2103 = vand.u32 %v2071, 2147483648
    %v2104 = vand.u32 %v2072, 2147483648
    %v2105 = vand.u32 %v2073, 2147483648
    %v2106 = vand.u32 %v2074, 2147483648
    %v2107 = vand.u32 %v2075, 2147483648
    %v2108 = vand.u32 %v2076, 2147483648
    %v2109 = vand.u32 %v2077, 2147483648
    %v2110 = vand.u32 %v2078, 2147483648
    %v2111 = vand.u32 %v2079, 2147483648
    %v2112 = vand.u32 %v2080, 2147483648
    %v2113 = vand.u32 %v2081, 2147483648
    %v2114 = vand.u32 %v2082, 2147483648
    %v2115 = vand.u32 %v2083, 2147483648
    %v2116 = vand.u32 %v2084, 2147483648
    %v2117 = vand.u32 %v2085, 2147483648
    %v2118 = vand.u32 %v2086, 2147483648
    %v2119 = vand.u32 %v2087, 2147483648
    %v2120 = vand.u32 %v2088, 2147483648
    %v2121 = vand.u32 %v2089, 2147483648
    %v2122 = vand.u32 %v2090, 2147483648
    %v2123 = vand.u32 %v2091, 2147483648
    %v2124 = vand.u32 %v2092, 2147483648
    %v2125 = vand.u32 %v2093, 2147483648
    %v2126 = vand.u32 %v2094, 2147483648
    %v2127 = vand.u32 %v2095, 2147483648
    %v2128 = vand.u32 %v2096, 2147483648
    %v2129 = vand.u32 %v2097, 2147483648
    %vm2130 = vcmp.ne.s32.totalorder %v2098, 0
    %vm2131 = vcmp.ne.s32.totalorder %v2099, 0
    %vm2132 = vcmp.ne.s32.totalorder %v2100, 0
    %vm2133 = vcmp.ne.s32.totalorder %v2101, 0
    %vm2134 = vcmp.ne.s32.totalorder %v2102, 0
    %vm2135 = vcmp.ne.s32.totalorder %v2103, 0
    %vm2136 = vcmp.ne.s32.totalorder %v2104, 0
    %vm2137 = vcmp.ne.s32.totalorder %v2105, 0
    %vm2138 = vcmp.ne.s32.totalorder %v2106, 0
    %vm2139 = vcmp.ne.s32.totalorder %v2107, 0
    %vm2140 = vcmp.ne.s32.totalorder %v2108, 0
    %vm2141 = vcmp.ne.s32.totalorder %v2109, 0
    %vm2142 = vcmp.ne.s32.totalorder %v2110, 0
    %vm2143 = vcmp.ne.s32.totalorder %v2111, 0
    %vm2144 = vcmp.ne.s32.totalorder %v2112, 0
    %vm2145 = vcmp.ne.s32.totalorder %v2113, 0
    %vm2146 = vcmp.ne.s32.totalorder %v2114, 0
    %vm2147 = vcmp.ne.s32.totalorder %v2115, 0
    %vm2148 = vcmp.ne.s32.totalorder %v2116, 0
    %vm2149 = vcmp.ne.s32.totalorder %v2117, 0
    %vm2150 = vcmp.ne.s32.totalorder %v2118, 0
    %vm2151 = vcmp.ne.s32.totalorder %v2119, 0
    %vm2152 = vcmp.ne.s32.totalorder %v2120, 0
    %vm2153 = vcmp.ne.s32.totalorder %v2121, 0
    %vm2154 = vcmp.ne.s32.totalorder %v2122, 0
    %vm2155 = vcmp.ne.s32.totalorder %v2123, 0
    %vm2156 = vcmp.ne.s32.totalorder %v2124, 0
    %vm2157 = vcmp.ne.s32.totalorder %v2125, 0
    %vm2158 = vcmp.ne.s32.totalorder %v2126, 0
    %vm2159 = vcmp.ne.s32.totalorder %v2127, 0
    %vm2160 = vcmp.ne.s32.totalorder %v2128, 0
    %vm2161 = vcmp.ne.s32.totalorder %v2129, 0
    %v2162 = vsel %vm2130, 2.0, 0.0
    %v2163 = vsel %vm2131, 2.0, 0.0
    %v2164 = vsel %vm2132, 2.0, 0.0
    %v2165 = vsel %vm2133, 2.0, 0.0
    %v2166 = vsel %vm2134, 2.0, 0.0
    %v2167 = vsel %vm2135, 2.0, 0.0
    %v2168 = vsel %vm2136, 2.0, 0.0
    %v2169 = vsel %vm2137, 2.0, 0.0
    %v2170 = vsel %vm2138, 2.0, 0.0
    %v2171 = vsel %vm2139, 2.0, 0.0
    %v2172 = vsel %vm2140, 2.0, 0.0
    %v2173 = vsel %vm2141, 2.0, 0.0
    %v2174 = vsel %vm2142, 2.0, 0.0
    %v2175 = vsel %vm2143, 2.0, 0.0
    %v2176 = vsel %vm2144, 2.0, 0.0
    %v2177 = vsel %vm2145, 2.0, 0.0
    %v2178 = vsel %vm2146, 2.0, 0.0
    %v2179 = vsel %vm2147, 2.0, 0.0
    %v2180 = vsel %vm2148, 2.0, 0.0
    %v2181 = vsel %vm2149, 2.0, 0.0
    %v2182 = vsel %vm2150, 2.0, 0.0
    %v2183 = vsel %vm2151, 2.0, 0.0
    %v2184 = vsel %vm2152, 2.0, 0.0
    %v2185 = vsel %vm2153, 2.0, 0.0
    %v2186 = vsel %vm2154, 2.0, 0.0
    %v2187 = vsel %vm2155, 2.0, 0.0
    %v2188 = vsel %vm2156, 2.0, 0.0
    %v2189 = vsel %vm2157, 2.0, 0.0
    %v2190 = vsel %vm2158, 2.0, 0.0
    %v2191 = vsel %vm2159, 2.0, 0.0
    %v2192 = vsel %vm2160, 2.0, 0.0
    %v2193 = vsel %vm2161, 2.0, 0.0
    %v2194 = vmul.f32 %v1776, %v2162
    %v2195 = vmul.f32 %v1777, %v2163
    %v2196 = vmul.f32 %v1778, %v2164
    %v2197 = vmul.f32 %v1779, %v2165
    %v2198 = vmul.f32 %v1780, %v2166
    %v2199 = vmul.f32 %v1781, %v2167
    %v2200 = vmul.f32 %v1782, %v2168
    %v2201 = vmul.f32 %v1783, %v2169
    %v2202 = vmul.f32 %v1784, %v2170
    %v2203 = vmul.f32 %v1785, %v2171
    %v2204 = vmul.f32 %v1786, %v2172
    %v2205 = vmul.f32 %v1787, %v2173
    %v2206 = vmul.f32 %v1788, %v2174
    %v2207 = vmul.f32 %v1789, %v2175
    %v2208 = vmul.f32 %v1790, %v2176
    %v2209 = vmul.f32 %v1791, %v2177
    %v2210 = vmul.f32 %v1792, %v2178
    %v2211 = vmul.f32 %v1793, %v2179
    %v2212 = vmul.f32 %v1794, %v2180
    %v2213 = vmul.f32 %v1795, %v2181
    %v2214 = vmul.f32 %v1796, %v2182
    %v2215 = vmul.f32 %v1797, %v2183
    %v2216 = vmul.f32 %v1798, %v2184
    %v2217 = vmul.f32 %v1799, %v2185
    %v2218 = vmul.f32 %v1800, %v2186
    %v2219 = vmul.f32 %v1801, %v2187
    %v2220 = vmul.f32 %v1802, %v2188
    %v2221 = vmul.f32 %v1803, %v2189
    %v2222 = vmul.f32 %v1804, %v2190
    %v2223 = vmul.f32 %v1805, %v2191
    %v2224 = vmul.f32 %v1806, %v2192
    %v2225 = vmul.f32 %v1807, %v2193
    %2226 = vst [vmem:[#allocation4] sm:$0xff] %v2194
    %2227 = vst [vmem:[#allocation4 + $0x8] sm:$0xff] %v2195
    %2228 = vst [vmem:[#allocation4 + $0x10] sm:$0xff] %v2196
    %2229 = vst [vmem:[#allocation4 + $0x18] sm:$0xff] %v2197
    %2230 = vst [vmem:[#allocation4 + $0x20] sm:$0xff] %v2198
    %2231 = vst [vmem:[#allocation4 + $0x28] sm:$0xff] %v2199
    %2232 = vst [vmem:[#allocation4 + $0x30] sm:$0xff] %v2200
    %2233 = vst [vmem:[#allocation4 + $0x38] sm:$0xff] %v2201
    %2234 = vst [vmem:[#allocation4 + $0x40] sm:$0xff] %v2202
    %2235 = vst [vmem:[#allocation4 + $0x48] sm:$0xff] %v2203
    %2236 = vst [vmem:[#allocation4 + $0x50] sm:$0xff] %v2204
    %2237 = vst [vmem:[#allocation4 + $0x58] sm:$0xff] %v2205
    %2238 = vst [vmem:[#allocation4 + $0x60] sm:$0xff] %v2206
    %2239 = vst [vmem:[#allocation4 + $0x68] sm:$0xff] %v2207
    %2240 = vst [vmem:[#allocation4 + $0x70] sm:$0xff] %v2208
    %2241 = vst [vmem:[#allocation4 + $0x78] sm:$0xff] %v2209
    %2242 = vst [vmem:[#allocation4 + $0x80] sm:$0xff] %v2210
    %2243 = vst [vmem:[#allocation4 + $0x88] sm:$0xff] %v2211
    %2244 = vst [vmem:[#allocation4 + $0x90] sm:$0xff] %v2212
    %2245 = vst [vmem:[#allocation4 + $0x98] sm:$0xff] %v2213
    %2246 = vst [vmem:[#allocation4 + $0xa0] sm:$0xff] %v2214
    %2247 = vst [vmem:[#allocation4 + $0xa8] sm:$0xff] %v2215
    %2248 = vst [vmem:[#allocation4 + $0xb0] sm:$0xff] %v2216
    %2249 = vst [vmem:[#allocation4 + $0xb8] sm:$0xff] %v2217
    %2250 = vst [vmem:[#allocation4 + $0xc0] sm:$0xff] %v2218
    %2251 = vst [vmem:[#allocation4 + $0xc8] sm:$0xff] %v2219
    %2252 = vst [vmem:[#allocation4 + $0xd0] sm:$0xff] %v2220
    %2253 = vst [vmem:[#allocation4 + $0xd8] sm:$0xff] %v2221
    %2254 = vst [vmem:[#allocation4 + $0xe0] sm:$0xff] %v2222
    %2255 = vst [vmem:[#allocation4 + $0xe8] sm:$0xff] %v2223
    %2256 = vst [vmem:[#allocation4 + $0xf0] sm:$0xff] %v2224
    %2257 = vst [vmem:[#allocation4 + $0xf8] sm:$0xff] %v2225
    // Predicated region
    $region22: #{tpu_custom_call.1} parent=1 // pred_check
      _
    $region23: #{tpu_custom_call.1} parent=1 // pred_check_branch
      %2259 = sbr.rel (0) target = $region25
    $region24: #{tpu_custom_call.1} parent=1 // pred_region
      %s2261 = ssub.s32 4096, 4096
      %2262 = vsyncadd [#allocation5], %s2261
      %s2263 = sshll.u32 [#allocation4], 4
      %s2264 = int_to_ptr.vmem [resolvable:$true] %s2263
      %2269 = dma.vmem_to_hbm [thread:$0]  %s2264, 4096, %s6, [#allocation5], 128, 128, 8
    $region25: #{tpu_custom_call.1} parent=1 // pred_fallthru
      _
    // Predicated region
    $region26: #{tpu_custom_call.1} parent=1 // pred_check
      _
    $region27: #{tpu_custom_call.1} parent=1 // pred_check_branch
      %2271 = sbr.rel (0) target = $region29
    $region28: #{tpu_custom_call.1} parent=1 // pred_region
      %2272 = dma.done [#allocation5], 4096
    $region29: #{tpu_custom_call.1} parent=1 // pred_fallthru
      _
    %2273 = vsyncpa [#allocation5], 1

</llo_original>
